<compile_context>
chip_gen: v6e
topology: v6e:2x2x1
jax: 0.10.0
libtpu: 0.0.40
codegen_flags: <defaults>
</compile_context>

<pallas_src>
import functools

import jax
import jax.numpy as jnp
import numpy as np
from jax.experimental import pallas as pl
from jax.experimental.pallas import tpu as pltpu

INPUT_SIZE = 28
IP = 32              # input dim padded to a sublane multiple (col 28 carries the ones/bias)
HIDDEN = 64          # PyTorch hidden size
HP = 128             # hidden padded to a full 128-lane vreg width
NUM_CLASSES = 10
NCP = 128            # classes padded to 128 lanes (lane-dense, unmasked output store)


def lstm_fc_kernel(x_ref, w_ref, fc_ref, out_ref, gx_ref,
                   *, seq_len, batch_p, input_p, hidden_p):
    T, Bp, IPk, H = seq_len, batch_p, input_p, hidden_p

    # ---- Phase 1: input projection for ALL timesteps as one MXU matmul. --------
    # x is augmented with a ones column, so the (pre-scaled) bias is fused into the
    # same matmul.  Result staged in VMEM scratch to bound vreg pressure.
    gx_ref[...] = jnp.dot(x_ref[...], w_ref[0:IPk, :],
                          preferred_element_type=jnp.float32)        # (T*Bp, 4*H)

    # Hoist the recurrent weight load out of the time loop (rows 32:160, aligned).
    whh = w_ref[IPk:IPk + H, :]                                       # (H, 4*H)

    # ---- Phase 2: serial recurrence, fully unrolled (T small & static). --------
    h = jnp.zeros((Bp, H), jnp.float32)
    c = jnp.zeros((Bp, H), jnp.float32)
    for t in range(T):
        # Sublane-tile-aligned static slice: rows t*8 .. t*8+8.
        gx_t = gx_ref[t * Bp:(t + 1) * Bp, :]                         # (Bp, 4*H)
        if t == 0:
            # h == 0: skip the MXU push on the serial critical path.
            gates = gx_t
        else:
            gates = gx_t + jnp.dot(h, whh,
                                   preferred_element_type=jnp.float32)

        # One fused EUP tanh over all four gates; i/f/o columns were pre-scaled by
        # 0.5 in the wrapper, so 0.5*tanh(.)+0.5 == sigmoid of the original gate.
        tg = jnp.tanh(gates)                                          # (Bp, 4*H)
        i_g = 0.5 * tg[:, 0 * H:1 * H] + 0.5
        f_g = 0.5 * tg[:, 1 * H:2 * H] + 0.5
        g_g = tg[:, 2 * H:3 * H]
        o_g = 0.5 * tg[:, 3 * H:4 * H] + 0.5

        if t == 0:
            c = i_g * g_g                                             # c_prev == 0
        else:
            c = f_g * c + i_g * g_g
        h = o_g * jnp.tanh(c)

    # ---- Phase 3: FC head on the last hidden state (lane-dense (8,128) store). --
    out_ref[...] = (jnp.dot(h, fc_ref[0:H, :],
                            preferred_element_type=jnp.float32)
                    + fc_ref[H:H + 1, :]).astype(out_ref.dtype)


def _prep_gate_cols(w, h, hp):
    """w: (rows, 4*h), torch gate order [i|f|g|o].

    Scales the i/f/o gate columns by 0.5 (for the fused-tanh sigmoid trick) and
    zero-pads each gate from h -> hp lanes.  Returns (rows, 4*hp)."""
    rows = w.shape[0]
    w4 = w.reshape(rows, 4, h)
    gate_scale = jnp.array([0.5, 0.5, 1.0, 0.5], jnp.float32).reshape(1, 4, 1)
    w4 = w4 * gate_scale
    w4 = jnp.pad(w4, ((0, 0), (0, 0), (0, hp - h)))
    return w4.reshape(rows, 4 * hp)


def rnn_forward(x, w_ih, w_hh, b_ih, b_hh, w_fc, b_fc):
    """Forward of the PyTorch RNN module. x: (B, T, INPUT_SIZE) float32 (batch_first)."""
    B, T, I = x.shape
    H = w_hh.shape[1]                                       # 64
    Bp = max(8, ((B + 7) // 8) * 8)                         # pad batch to a sublane tile

    # ---- One-time glue (plain JAX): time-major, batch-padded, bias-augmented x. ----
    x_tm = jnp.transpose(x, (1, 0, 2))                      # (T, B, I)
    x_tm = jnp.pad(x_tm, ((0, 0), (0, Bp - B), (0, 0)))     # (T, Bp, I)
    x_tm = x_tm.reshape(T * Bp, I)
    x_aug = jnp.concatenate(
        [x_tm,
         jnp.ones((T * Bp, 1), jnp.float32),                # ones column -> fused bias
         jnp.zeros((T * Bp, IP - I - 1), jnp.float32)],
        axis=1)                                             # (T*Bp, IP)

    # ---- Packed weight slab: [W_ih^T | fused bias | zero pad | W_hh^T] -> (IP+HP, 4*HP).
    wih_p = _prep_gate_cols(w_ih.T, H, HP)                                   # (I, 4*HP)
    bias_p = _prep_gate_cols((b_ih + b_hh).reshape(1, 4 * H), H, HP)         # (1, 4*HP)
    whh_p = jnp.pad(_prep_gate_cols(w_hh.T, H, HP), ((0, HP - H), (0, 0)))   # (HP, 4*HP)
    w_slab = jnp.concatenate(
        [wih_p, bias_p, jnp.zeros((IP - I - 1, 4 * HP), jnp.float32), whh_p],
        axis=0)                                                              # (IP+HP, 4*HP)

    # ---- Packed FC slab: [W_fc^T | b_fc | zero pad] -> (HP+8, NCP). ----
    wfc_p = jnp.pad(w_fc.T, ((0, HP - H), (0, NCP - NUM_CLASSES)))           # (HP, NCP)
    bfc_p = jnp.pad(b_fc.reshape(1, -1), ((0, 0), (0, NCP - NUM_CLASSES)))   # (1, NCP)
    fc_slab = jnp.concatenate(
        [wfc_p, bfc_p, jnp.zeros((7, NCP), jnp.float32)], axis=0)            # (HP+8, NCP)

    kernel = functools.partial(lstm_fc_kernel, seq_len=T, batch_p=Bp,
                               input_p=IP, hidden_p=HP)
    vmem = pltpu.MemorySpace.VMEM

    out_p = pl.pallas_call(
        kernel,
        out_shape=jax.ShapeDtypeStruct((Bp, NCP), jnp.float32),
        in_specs=[pl.BlockSpec(memory_space=vmem)] * 3,
        out_specs=pl.BlockSpec(memory_space=vmem),
        scratch_shapes=[pltpu.VMEM((T * Bp, 4 * HP), jnp.float32)],
    )(x_aug, w_slab, fc_slab)

    return out_p[:B, :NUM_CLASSES]


def rnn_forward_ref(x, w_ih, w_hh, b_ih, b_hh, w_fc, b_fc):
    """Pure-JAX reference matching torch.nn.LSTM (gate order i,f,g,o) + Linear head."""
    B, T, I = x.shape
    H = w_hh.shape[1]
    h = jnp.zeros((B, H), jnp.float32)
    c = jnp.zeros((B, H), jnp.float32)

    def step(carry, x_t):
        h, c = carry
        gates = x_t @ w_ih.T + h @ w_hh.T + b_ih + b_hh
        i = jax.nn.sigmoid(gates[:, 0 * H:1 * H])
        f = jax.nn.sigmoid(gates[:, 1 * H:2 * H])
        g = jnp.tanh(gates[:, 2 * H:3 * H])
        o = jax.nn.sigmoid(gates[:, 3 * H:4 * H])
        c = f * c + i * g
        h = o * jnp.tanh(c)
        return (h, c), None

    (h, c), _ = jax.lax.scan(step, (h, c), jnp.transpose(x, (1, 0, 2)))
    return h @ w_fc.T + b_fc


if __name__ == "__main__":
    B, T = 2, 8
    key = jax.random.PRNGKey(0)
    ks = jax.random.split(key, 7)

    k_lstm = 1.0 / np.sqrt(HIDDEN)                 # torch LSTM init bound
    k_fc = 1.0 / np.sqrt(HIDDEN)                   # torch Linear init bound

    x = jax.random.normal(ks[0], (B, T, INPUT_SIZE), jnp.float32)
    w_ih = jax.random.uniform(ks[1], (4 * HIDDEN, INPUT_SIZE), jnp.float32, -k_lstm, k_lstm)
    w_hh = jax.random.uniform(ks[2], (4 * HIDDEN, HIDDEN), jnp.float32, -k_lstm, k_lstm)
    b_ih = jax.random.uniform(ks[3], (4 * HIDDEN,), jnp.float32, -k_lstm, k_lstm)
    b_hh = jax.random.uniform(ks[4], (4 * HIDDEN,), jnp.float32, -k_lstm, k_lstm)
    w_fc = jax.random.uniform(ks[5], (NUM_CLASSES, HIDDEN), jnp.float32, -k_fc, k_fc)
    b_fc = jax.random.uniform(ks[6], (NUM_CLASSES,), jnp.float32, -k_fc, k_fc)

    out = rnn_forward(x, w_ih, w_hh, b_ih, b_hh, w_fc, b_fc)
    out = jax.block_until_ready(out)

    ref = rnn_forward_ref(x, w_ih, w_hh, b_ih, b_hh, w_fc, b_fc)
    np.testing.assert_allclose(np.asarray(out), np.asarray(ref), rtol=1e-4, atol=1e-4)

    print("KERNEL_OK")
</pallas_src>

<mosaic_0001>
module attributes {stable_mosaic.version = 11 : i64} {
  func.func @lstm_fc_kernel(%arg0: memref<64x32xf32, #tpu.memory_space<vmem>>, %arg1: memref<160x512xf32, #tpu.memory_space<vmem>>, %arg2: memref<136x128xf32, #tpu.memory_space<vmem>>, %arg3: memref<8x128xf32, #tpu.memory_space<vmem>>, %arg4: memref<64x512xf32, #tpu.memory_space<vmem>>) attributes {dimension_semantics = [], scalar_prefetch = 0 : i64, scratch_operands = 1 : i64, tpu.core_type = #tpu.core_type<tc>} {
    %c0 = arith.constant 0 : index
    %c0_0 = arith.constant 0 : index
    %0 = vector.load %arg0[%c0, %c0_0] : memref<64x32xf32, #tpu.memory_space<vmem>>, vector<64x32xf32>
    %c0_1 = arith.constant 0 : index
    %c0_2 = arith.constant 0 : index
    %1 = vector.load %arg1[%c0_1, %c0_2] : memref<160x512xf32, #tpu.memory_space<vmem>>, vector<32x512xf32>
    %cst = arith.constant dense<0.000000e+00> : vector<64x512xf32>
    %2 = tpu.matmul %0, %1, %cst {dimension_numbers = #tpu.dot_dimension_numbers<[1], [0], [0], [1], [0, 0, 1, 1], [], []>} : vector<64x32xf32>, vector<32x512xf32>, vector<64x512xf32> -> vector<64x512xf32>
    %c0_3 = arith.constant 0 : index
    %c0_4 = arith.constant 0 : index
    %3 = vector.load %arg4[%c0_3, %c0_4] : memref<64x512xf32, #tpu.memory_space<vmem>>, vector<64x512xf32>
    tpu.vector_store %arg4[%c0_3, %c0_4], %2 {strides = array<i32>} : memref<64x512xf32, #tpu.memory_space<vmem>>, vector<64x512xf32>,
    %c32 = arith.constant 32 : index
    %c0_5 = arith.constant 0 : index
    %4 = vector.load %arg1[%c32, %c0_5] : memref<160x512xf32, #tpu.memory_space<vmem>>, vector<128x512xf32>
    %c0_6 = arith.constant 0 : index
    %c0_7 = arith.constant 0 : index
    %5 = vector.load %arg4[%c0_6, %c0_7] : memref<64x512xf32, #tpu.memory_space<vmem>>, vector<8x512xf32>
    %6 = math.tanh %5 : vector<8x512xf32>
    %7 = vector.extract_strided_slice %6 {offsets = [0, 0], sizes = [8, 128], strides = [1, 1]} : vector<8x512xf32> to vector<8x128xf32>
    %cst_8 = arith.constant 5.000000e-01 : f32
    %8 = vector.broadcast %cst_8 : f32 to vector<8x128xf32>
    %9 = arith.mulf %8, %7 : vector<8x128xf32>
    %cst_9 = arith.constant 5.000000e-01 : f32
    %10 = vector.broadcast %cst_9 : f32 to vector<8x128xf32>
    %11 = arith.addf %9, %10 : vector<8x128xf32>
    %12 = vector.extract_strided_slice %6 {offsets = [0, 256], sizes = [8, 128], strides = [1, 1]} : vector<8x512xf32> to vector<8x128xf32>
    %13 = vector.extract_strided_slice %6 {offsets = [0, 384], sizes = [8, 128], strides = [1, 1]} : vector<8x512xf32> to vector<8x128xf32>
    %cst_10 = arith.constant 5.000000e-01 : f32
    %14 = vector.broadcast %cst_10 : f32 to vector<8x128xf32>
    %15 = arith.mulf %14, %13 : vector<8x128xf32>
    %cst_11 = arith.constant 5.000000e-01 : f32
    %16 = vector.broadcast %cst_11 : f32 to vector<8x128xf32>
    %17 = arith.addf %15, %16 : vector<8x128xf32>
    %18 = arith.mulf %11, %12 : vector<8x128xf32>
    %19 = math.tanh %18 : vector<8x128xf32>
    %20 = arith.mulf %17, %19 : vector<8x128xf32>
    %c8 = arith.constant 8 : index
    %c0_12 = arith.constant 0 : index
    %21 = vector.load %arg4[%c8, %c0_12] : memref<64x512xf32, #tpu.memory_space<vmem>>, vector<8x512xf32>
    %cst_13 = arith.constant dense<0.000000e+00> : vector<8x512xf32>
    %22 = tpu.matmul %20, %4, %cst_13 {dimension_numbers = #tpu.dot_dimension_numbers<[1], [0], [0], [1], [0, 0, 1, 1], [], []>} : vector<8x128xf32>, vector<128x512xf32>, vector<8x512xf32> -> vector<8x512xf32>
    %23 = arith.addf %21, %22 : vector<8x512xf32>
    %24 = math.tanh %23 : vector<8x512xf32>
    %25 = vector.extract_strided_slice %24 {offsets = [0, 0], sizes = [8, 128], strides = [1, 1]} : vector<8x512xf32> to vector<8x128xf32>
    %cst_14 = arith.constant 5.000000e-01 : f32
    %26 = vector.broadcast %cst_14 : f32 to vector<8x128xf32>
    %27 = arith.mulf %26, %25 : vector<8x128xf32>
    %cst_15 = arith.constant 5.000000e-01 : f32
    %28 = vector.broadcast %cst_15 : f32 to vector<8x128xf32>
    %29 = arith.addf %27, %28 : vector<8x128xf32>
    %30 = vector.extract_strided_slice %24 {offsets = [0, 128], sizes = [8, 128], strides = [1, 1]} : vector<8x512xf32> to vector<8x128xf32>
    %cst_16 = arith.constant 5.000000e-01 : f32
    %31 = vector.broadcast %cst_16 : f32 to vector<8x128xf32>
    %32 = arith.mulf %31, %30 : vector<8x128xf32>
    %cst_17 = arith.constant 5.000000e-01 : f32
    %33 = vector.broadcast %cst_17 : f32 to vector<8x128xf32>
    %34 = arith.addf %32, %33 : vector<8x128xf32>
    %35 = vector.extract_strided_slice %24 {offsets = [0, 256], sizes = [8, 128], strides = [1, 1]} : vector<8x512xf32> to vector<8x128xf32>
    %36 = vector.extract_strided_slice %24 {offsets = [0, 384], sizes = [8, 128], strides = [1, 1]} : vector<8x512xf32> to vector<8x128xf32>
    %cst_18 = arith.constant 5.000000e-01 : f32
    %37 = vector.broadcast %cst_18 : f32 to vector<8x128xf32>
    %38 = arith.mulf %37, %36 : vector<8x128xf32>
    %cst_19 = arith.constant 5.000000e-01 : f32
    %39 = vector.broadcast %cst_19 : f32 to vector<8x128xf32>
    %40 = arith.addf %38, %39 : vector<8x128xf32>
    %41 = arith.mulf %34, %18 : vector<8x128xf32>
    %42 = arith.mulf %29, %35 : vector<8x128xf32>
    %43 = arith.addf %41, %42 : vector<8x128xf32>
    %44 = math.tanh %43 : vector<8x128xf32>
    %45 = arith.mulf %40, %44 : vector<8x128xf32>
    %c16 = arith.constant 16 : index
    %c0_20 = arith.constant 0 : index
    %46 = vector.load %arg4[%c16, %c0_20] : memref<64x512xf32, #tpu.memory_space<vmem>>, vector<8x512xf32>
    %cst_21 = arith.constant dense<0.000000e+00> : vector<8x512xf32>
    %47 = tpu.matmul %45, %4, %cst_21 {dimension_numbers = #tpu.dot_dimension_numbers<[1], [0], [0], [1], [0, 0, 1, 1], [], []>} : vector<8x128xf32>, vector<128x512xf32>, vector<8x512xf32> -> vector<8x512xf32>
    %48 = arith.addf %46, %47 : vector<8x512xf32>
    %49 = math.tanh %48 : vector<8x512xf32>
    %50 = vector.extract_strided_slice %49 {offsets = [0, 0], sizes = [8, 128], strides = [1, 1]} : vector<8x512xf32> to vector<8x128xf32>
    %cst_22 = arith.constant 5.000000e-01 : f32
    %51 = vector.broadcast %cst_22 : f32 to vector<8x128xf32>
    %52 = arith.mulf %51, %50 : vector<8x128xf32>
    %cst_23 = arith.constant 5.000000e-01 : f32
    %53 = vector.broadcast %cst_23 : f32 to vector<8x128xf32>
    %54 = arith.addf %52, %53 : vector<8x128xf32>
    %55 = vector.extract_strided_slice %49 {offsets = [0, 128], sizes = [8, 128], strides = [1, 1]} : vector<8x512xf32> to vector<8x128xf32>
    %cst_24 = arith.constant 5.000000e-01 : f32
    %56 = vector.broadcast %cst_24 : f32 to vector<8x128xf32>
    %57 = arith.mulf %56, %55 : vector<8x128xf32>
    %cst_25 = arith.constant 5.000000e-01 : f32
    %58 = vector.broadcast %cst_25 : f32 to vector<8x128xf32>
    %59 = arith.addf %57, %58 : vector<8x128xf32>
    %60 = vector.extract_strided_slice %49 {offsets = [0, 256], sizes = [8, 128], strides = [1, 1]} : vector<8x512xf32> to vector<8x128xf32>
    %61 = vector.extract_strided_slice %49 {offsets = [0, 384], sizes = [8, 128], strides = [1, 1]} : vector<8x512xf32> to vector<8x128xf32>
    %cst_26 = arith.constant 5.000000e-01 : f32
    %62 = vector.broadcast %cst_26 : f32 to vector<8x128xf32>
    %63 = arith.mulf %62, %61 : vector<8x128xf32>
    %cst_27 = arith.constant 5.000000e-01 : f32
    %64 = vector.broadcast %cst_27 : f32 to vector<8x128xf32>
    %65 = arith.addf %63, %64 : vector<8x128xf32>
    %66 = arith.mulf %59, %43 : vector<8x128xf32>
    %67 = arith.mulf %54, %60 : vector<8x128xf32>
    %68 = arith.addf %66, %67 : vector<8x128xf32>
    %69 = math.tanh %68 : vector<8x128xf32>
    %70 = arith.mulf %65, %69 : vector<8x128xf32>
    %c24 = arith.constant 24 : index
    %c0_28 = arith.constant 0 : index
    %71 = vector.load %arg4[%c24, %c0_28] : memref<64x512xf32, #tpu.memory_space<vmem>>, vector<8x512xf32>
    %cst_29 = arith.constant dense<0.000000e+00> : vector<8x512xf32>
    %72 = tpu.matmul %70, %4, %cst_29 {dimension_numbers = #tpu.dot_dimension_numbers<[1], [0], [0], [1], [0, 0, 1, 1], [], []>} : vector<8x128xf32>, vector<128x512xf32>, vector<8x512xf32> -> vector<8x512xf32>
    %73 = arith.addf %71, %72 : vector<8x512xf32>
    %74 = math.tanh %73 : vector<8x512xf32>
    %75 = vector.extract_strided_slice %74 {offsets = [0, 0], sizes = [8, 128], strides = [1, 1]} : vector<8x512xf32> to vector<8x128xf32>
    %cst_30 = arith.constant 5.000000e-01 : f32
    %76 = vector.broadcast %cst_30 : f32 to vector<8x128xf32>
    %77 = arith.mulf %76, %75 : vector<8x128xf32>
    %cst_31 = arith.constant 5.000000e-01 : f32
    %78 = vector.broadcast %cst_31 : f32 to vector<8x128xf32>
    %79 = arith.addf %77, %78 : vector<8x128xf32>
    %80 = vector.extract_strided_slice %74 {offsets = [0, 128], sizes = [8, 128], strides = [1, 1]} : vector<8x512xf32> to vector<8x128xf32>
    %cst_32 = arith.constant 5.000000e-01 : f32
    %81 = vector.broadcast %cst_32 : f32 to vector<8x128xf32>
    %82 = arith.mulf %81, %80 : vector<8x128xf32>
    %cst_33 = arith.constant 5.000000e-01 : f32
    %83 = vector.broadcast %cst_33 : f32 to vector<8x128xf32>
    %84 = arith.addf %82, %83 : vector<8x128xf32>
    %85 = vector.extract_strided_slice %74 {offsets = [0, 256], sizes = [8, 128], strides = [1, 1]} : vector<8x512xf32> to vector<8x128xf32>
    %86 = vector.extract_strided_slice %74 {offsets = [0, 384], sizes = [8, 128], strides = [1, 1]} : vector<8x512xf32> to vector<8x128xf32>
    %cst_34 = arith.constant 5.000000e-01 : f32
    %87 = vector.broadcast %cst_34 : f32 to vector<8x128xf32>
    %88 = arith.mulf %87, %86 : vector<8x128xf32>
    %cst_35 = arith.constant 5.000000e-01 : f32
    %89 = vector.broadcast %cst_35 : f32 to vector<8x128xf32>
    %90 = arith.addf %88, %89 : vector<8x128xf32>
    %91 = arith.mulf %84, %68 : vector<8x128xf32>
    %92 = arith.mulf %79, %85 : vector<8x128xf32>
    %93 = arith.addf %91, %92 : vector<8x128xf32>
    %94 = math.tanh %93 : vector<8x128xf32>
    %95 = arith.mulf %90, %94 : vector<8x128xf32>
    %c32_36 = arith.constant 32 : index
    %c0_37 = arith.constant 0 : index
    %96 = vector.load %arg4[%c32_36, %c0_37] : memref<64x512xf32, #tpu.memory_space<vmem>>, vector<8x512xf32>
    %cst_38 = arith.constant dense<0.000000e+00> : vector<8x512xf32>
    %97 = tpu.matmul %95, %4, %cst_38 {dimension_numbers = #tpu.dot_dimension_numbers<[1], [0], [0], [1], [0, 0, 1, 1], [], []>} : vector<8x128xf32>, vector<128x512xf32>, vector<8x512xf32> -> vector<8x512xf32>
    %98 = arith.addf %96, %97 : vector<8x512xf32>
    %99 = math.tanh %98 : vector<8x512xf32>
    %100 = vector.extract_strided_slice %99 {offsets = [0, 0], sizes = [8, 128], strides = [1, 1]} : vector<8x512xf32> to vector<8x128xf32>
    %cst_39 = arith.constant 5.000000e-01 : f32
    %101 = vector.broadcast %cst_39 : f32 to vector<8x128xf32>
    %102 = arith.mulf %101, %100 : vector<8x128xf32>
    %cst_40 = arith.constant 5.000000e-01 : f32
    %103 = vector.broadcast %cst_40 : f32 to vector<8x128xf32>
    %104 = arith.addf %102, %103 : vector<8x128xf32>
    %105 = vector.extract_strided_slice %99 {offsets = [0, 128], sizes = [8, 128], strides = [1, 1]} : vector<8x512xf32> to vector<8x128xf32>
    %cst_41 = arith.constant 5.000000e-01 : f32
    %106 = vector.broadcast %cst_41 : f32 to vector<8x128xf32>
    %107 = arith.mulf %106, %105 : vector<8x128xf32>
    %cst_42 = arith.constant 5.000000e-01 : f32
    %108 = vector.broadcast %cst_42 : f32 to vector<8x128xf32>
    %109 = arith.addf %107, %108 : vector<8x128xf32>
    %110 = vector.extract_strided_slice %99 {offsets = [0, 256], sizes = [8, 128], strides = [1, 1]} : vector<8x512xf32> to vector<8x128xf32>
    %111 = vector.extract_strided_slice %99 {offsets = [0, 384], sizes = [8, 128], strides = [1, 1]} : vector<8x512xf32> to vector<8x128xf32>
    %cst_43 = arith.constant 5.000000e-01 : f32
    %112 = vector.broadcast %cst_43 : f32 to vector<8x128xf32>
    %113 = arith.mulf %112, %111 : vector<8x128xf32>
    %cst_44 = arith.constant 5.000000e-01 : f32
    %114 = vector.broadcast %cst_44 : f32 to vector<8x128xf32>
    %115 = arith.addf %113, %114 : vector<8x128xf32>
    %116 = arith.mulf %109, %93 : vector<8x128xf32>
    %117 = arith.mulf %104, %110 : vector<8x128xf32>
    %118 = arith.addf %116, %117 : vector<8x128xf32>
    %119 = math.tanh %118 : vector<8x128xf32>
    %120 = arith.mulf %115, %119 : vector<8x128xf32>
    %c40 = arith.constant 40 : index
    %c0_45 = arith.constant 0 : index
    %121 = vector.load %arg4[%c40, %c0_45] : memref<64x512xf32, #tpu.memory_space<vmem>>, vector<8x512xf32>
    %cst_46 = arith.constant dense<0.000000e+00> : vector<8x512xf32>
    %122 = tpu.matmul %120, %4, %cst_46 {dimension_numbers = #tpu.dot_dimension_numbers<[1], [0], [0], [1], [0, 0, 1, 1], [], []>} : vector<8x128xf32>, vector<128x512xf32>, vector<8x512xf32> -> vector<8x512xf32>
    %123 = arith.addf %121, %122 : vector<8x512xf32>
    %124 = math.tanh %123 : vector<8x512xf32>
    %125 = vector.extract_strided_slice %124 {offsets = [0, 0], sizes = [8, 128], strides = [1, 1]} : vector<8x512xf32> to vector<8x128xf32>
    %cst_47 = arith.constant 5.000000e-01 : f32
    %126 = vector.broadcast %cst_47 : f32 to vector<8x128xf32>
    %127 = arith.mulf %126, %125 : vector<8x128xf32>
    %cst_48 = arith.constant 5.000000e-01 : f32
    %128 = vector.broadcast %cst_48 : f32 to vector<8x128xf32>
    %129 = arith.addf %127, %128 : vector<8x128xf32>
    %130 = vector.extract_strided_slice %124 {offsets = [0, 128], sizes = [8, 128], strides = [1, 1]} : vector<8x512xf32> to vector<8x128xf32>
    %cst_49 = arith.constant 5.000000e-01 : f32
    %131 = vector.broadcast %cst_49 : f32 to vector<8x128xf32>
    %132 = arith.mulf %131, %130 : vector<8x128xf32>
    %cst_50 = arith.constant 5.000000e-01 : f32
    %133 = vector.broadcast %cst_50 : f32 to vector<8x128xf32>
    %134 = arith.addf %132, %133 : vector<8x128xf32>
    %135 = vector.extract_strided_slice %124 {offsets = [0, 256], sizes = [8, 128], strides = [1, 1]} : vector<8x512xf32> to vector<8x128xf32>
    %136 = vector.extract_strided_slice %124 {offsets = [0, 384], sizes = [8, 128], strides = [1, 1]} : vector<8x512xf32> to vector<8x128xf32>
    %cst_51 = arith.constant 5.000000e-01 : f32
    %137 = vector.broadcast %cst_51 : f32 to vector<8x128xf32>
    %138 = arith.mulf %137, %136 : vector<8x128xf32>
    %cst_52 = arith.constant 5.000000e-01 : f32
    %139 = vector.broadcast %cst_52 : f32 to vector<8x128xf32>
    %140 = arith.addf %138, %139 : vector<8x128xf32>
    %141 = arith.mulf %134, %118 : vector<8x128xf32>
    %142 = arith.mulf %129, %135 : vector<8x128xf32>
    %143 = arith.addf %141, %142 : vector<8x128xf32>
    %144 = math.tanh %143 : vector<8x128xf32>
    %145 = arith.mulf %140, %144 : vector<8x128xf32>
    %c48 = arith.constant 48 : index
    %c0_53 = arith.constant 0 : index
    %146 = vector.load %arg4[%c48, %c0_53] : memref<64x512xf32, #tpu.memory_space<vmem>>, vector<8x512xf32>
    %cst_54 = arith.constant dense<0.000000e+00> : vector<8x512xf32>
    %147 = tpu.matmul %145, %4, %cst_54 {dimension_numbers = #tpu.dot_dimension_numbers<[1], [0], [0], [1], [0, 0, 1, 1], [], []>} : vector<8x128xf32>, vector<128x512xf32>, vector<8x512xf32> -> vector<8x512xf32>
    %148 = arith.addf %146, %147 : vector<8x512xf32>
    %149 = math.tanh %148 : vector<8x512xf32>
    %150 = vector.extract_strided_slice %149 {offsets = [0, 0], sizes = [8, 128], strides = [1, 1]} : vector<8x512xf32> to vector<8x128xf32>
    %cst_55 = arith.constant 5.000000e-01 : f32
    %151 = vector.broadcast %cst_55 : f32 to vector<8x128xf32>
    %152 = arith.mulf %151, %150 : vector<8x128xf32>
    %cst_56 = arith.constant 5.000000e-01 : f32
    %153 = vector.broadcast %cst_56 : f32 to vector<8x128xf32>
    %154 = arith.addf %152, %153 : vector<8x128xf32>
    %155 = vector.extract_strided_slice %149 {offsets = [0, 128], sizes = [8, 128], strides = [1, 1]} : vector<8x512xf32> to vector<8x128xf32>
    %cst_57 = arith.constant 5.000000e-01 : f32
    %156 = vector.broadcast %cst_57 : f32 to vector<8x128xf32>
    %157 = arith.mulf %156, %155 : vector<8x128xf32>
    %cst_58 = arith.constant 5.000000e-01 : f32
    %158 = vector.broadcast %cst_58 : f32 to vector<8x128xf32>
    %159 = arith.addf %157, %158 : vector<8x128xf32>
    %160 = vector.extract_strided_slice %149 {offsets = [0, 256], sizes = [8, 128], strides = [1, 1]} : vector<8x512xf32> to vector<8x128xf32>
    %161 = vector.extract_strided_slice %149 {offsets = [0, 384], sizes = [8, 128], strides = [1, 1]} : vector<8x512xf32> to vector<8x128xf32>
    %cst_59 = arith.constant 5.000000e-01 : f32
    %162 = vector.broadcast %cst_59 : f32 to vector<8x128xf32>
    %163 = arith.mulf %162, %161 : vector<8x128xf32>
    %cst_60 = arith.constant 5.000000e-01 : f32
    %164 = vector.broadcast %cst_60 : f32 to vector<8x128xf32>
    %165 = arith.addf %163, %164 : vector<8x128xf32>
    %166 = arith.mulf %159, %143 : vector<8x128xf32>
    %167 = arith.mulf %154, %160 : vector<8x128xf32>
    %168 = arith.addf %166, %167 : vector<8x128xf32>
    %169 = math.tanh %168 : vector<8x128xf32>
    %170 = arith.mulf %165, %169 : vector<8x128xf32>
    %c56 = arith.constant 56 : index
    %c0_61 = arith.constant 0 : index
    %171 = vector.load %arg4[%c56, %c0_61] : memref<64x512xf32, #tpu.memory_space<vmem>>, vector<8x512xf32>
    %cst_62 = arith.constant dense<0.000000e+00> : vector<8x512xf32>
    %172 = tpu.matmul %170, %4, %cst_62 {dimension_numbers = #tpu.dot_dimension_numbers<[1], [0], [0], [1], [0, 0, 1, 1], [], []>} : vector<8x128xf32>, vector<128x512xf32>, vector<8x512xf32> -> vector<8x512xf32>
    %173 = arith.addf %171, %172 : vector<8x512xf32>
    %174 = math.tanh %173 : vector<8x512xf32>
    %175 = vector.extract_strided_slice %174 {offsets = [0, 0], sizes = [8, 128], strides = [1, 1]} : vector<8x512xf32> to vector<8x128xf32>
    %cst_63 = arith.constant 5.000000e-01 : f32
    %176 = vector.broadcast %cst_63 : f32 to vector<8x128xf32>
    %177 = arith.mulf %176, %175 : vector<8x128xf32>
    %cst_64 = arith.constant 5.000000e-01 : f32
    %178 = vector.broadcast %cst_64 : f32 to vector<8x128xf32>
    %179 = arith.addf %177, %178 : vector<8x128xf32>
    %180 = vector.extract_strided_slice %174 {offsets = [0, 128], sizes = [8, 128], strides = [1, 1]} : vector<8x512xf32> to vector<8x128xf32>
    %cst_65 = arith.constant 5.000000e-01 : f32
    %181 = vector.broadcast %cst_65 : f32 to vector<8x128xf32>
    %182 = arith.mulf %181, %180 : vector<8x128xf32>
    %cst_66 = arith.constant 5.000000e-01 : f32
    %183 = vector.broadcast %cst_66 : f32 to vector<8x128xf32>
    %184 = arith.addf %182, %183 : vector<8x128xf32>
    %185 = vector.extract_strided_slice %174 {offsets = [0, 256], sizes = [8, 128], strides = [1, 1]} : vector<8x512xf32> to vector<8x128xf32>
    %186 = vector.extract_strided_slice %174 {offsets = [0, 384], sizes = [8, 128], strides = [1, 1]} : vector<8x512xf32> to vector<8x128xf32>
    %cst_67 = arith.constant 5.000000e-01 : f32
    %187 = vector.broadcast %cst_67 : f32 to vector<8x128xf32>
    %188 = arith.mulf %187, %186 : vector<8x128xf32>
    %cst_68 = arith.constant 5.000000e-01 : f32
    %189 = vector.broadcast %cst_68 : f32 to vector<8x128xf32>
    %190 = arith.addf %188, %189 : vector<8x128xf32>
    %191 = arith.mulf %184, %168 : vector<8x128xf32>
    %192 = arith.mulf %179, %185 : vector<8x128xf32>
    %193 = arith.addf %191, %192 : vector<8x128xf32>
    %194 = math.tanh %193 : vector<8x128xf32>
    %195 = arith.mulf %190, %194 : vector<8x128xf32>
    %c0_69 = arith.constant 0 : index
    %c0_70 = arith.constant 0 : index
    %196 = vector.load %arg2[%c0_69, %c0_70] : memref<136x128xf32, #tpu.memory_space<vmem>>, vector<128x128xf32>
    %cst_71 = arith.constant dense<0.000000e+00> : vector<8x128xf32>
    %197 = tpu.matmul %195, %196, %cst_71 {dimension_numbers = #tpu.dot_dimension_numbers<[1], [0], [0], [1], [0, 0, 1, 1], [], []>} : vector<8x128xf32>, vector<128x128xf32>, vector<8x128xf32> -> vector<8x128xf32>
    %c128 = arith.constant 128 : index
    %c0_72 = arith.constant 0 : index
    %198 = vector.load %arg2[%c128, %c0_72] : memref<136x128xf32, #tpu.memory_space<vmem>>, vector<1x128xf32>
    %199 = vector.broadcast %198 : vector<1x128xf32> to vector<8x128xf32>
    %200 = arith.addf %197, %199 : vector<8x128xf32>
    %c0_73 = arith.constant 0 : index
    %c0_74 = arith.constant 0 : index
    %201 = vector.load %arg3[%c0_73, %c0_74] : memref<8x128xf32, #tpu.memory_space<vmem>>, vector<8x128xf32>
    tpu.vector_store %arg3[%c0_73, %c0_74], %200 {strides = array<i32>} : memref<8x128xf32, #tpu.memory_space<vmem>>, vector<8x128xf32>,
    return
  }
}

</mosaic_0001>

<llo_original>
// kernel: tpu_custom_call.1
$region0: #{tpu_custom_call.1}
  #allocation0 [shape = 'u32[]', space=smem, size = 0x4, offset = 0x4, fixed_abs, tag = 'smem constant byte address 0x4 - core index']
  #allocation1 [shape = 'u32[144,128]{1,0:T(1,128)}', space=vmem, size = 0x12000, scoped, tag = 'internal scratch']
  #allocation2 [shape = 'f32[64,512]{1,0:T(8,128)}', space=vmem, size = 0x20000, scoped, tag = 'scratch operand']
  %s0 = inlined_call_operand.vmem [shape: f32[64,32], index: 0, kind: input, shape index: {}]
  %s1 = inlined_call_operand.hbm [shape: f32[160,512], index: 1, kind: input, shape index: {}]
  %s2 = inlined_call_operand.hbm [shape: f32[136,128], index: 2, kind: input, shape index: {}]
  %s3 = inlined_call_operand.hbm [shape: f32[8,128], index: 3, kind: output, shape index: {}]
  %s4 = sld [smem:[#allocation0]]
  $region30: #{tpu_custom_call.1} parent=0
    _
  %s6 = ssub.s32 1, %s4
  %s7 = scalar_select 0, %s6, %s4
  $region1: #{tpu_custom_call.1} parent=0
    #allocation3 [shape = 'u8[327680]{0}', space=vmem, size = 0x50000, scoped, tag = 'input window, operand 1, single buffered']
    #allocation4 [shape = 's32[1]{0}', space=sflag, size = 0x4, scoped, tag = 'scoped memory for tpu_custom_call.1']
    #allocation5 [shape = 's32[1]{0}', space=sflag, size = 0x4, scoped, tag = 'scoped memory for tpu_custom_call.1']
    #allocation6 [shape = 'u8[69632]{0}', space=vmem, size = 0x11000, scoped, tag = 'input window, operand 2, single buffered']
    #allocation7 [shape = 's32[1]{0}', space=sflag, size = 0x4, scoped, tag = 'scoped memory for tpu_custom_call.1']
    #allocation8 [shape = 'u8[4096]{0}', space=vmem, size = 0x1000, scoped, tag = 'output window, operand 0, single buffered']
    %8 = vsyncpa [#allocation4], 0
    %9 = vsyncpa [#allocation7], 0
    %10 = vsyncpa [#allocation5], 0
    // Predicated region
    $region2: #{tpu_custom_call.1} parent=1 // pred_check
      _
    $region3: #{tpu_custom_call.1} parent=1 // pred_check_branch
      %12 = sbr.rel (0) target = $region5
    $region4: #{tpu_custom_call.1} parent=1 // pred_region
      _
    $region5: #{tpu_custom_call.1} parent=1 // pred_fallthru
      _
    // Predicated region
    $region6: #{tpu_custom_call.1} parent=1 // pred_check
      _
    $region7: #{tpu_custom_call.1} parent=1 // pred_check_branch
      %14 = sbr.rel (0) target = $region9
    $region8: #{tpu_custom_call.1} parent=1 // pred_region
      %s16 = ssub.s32 10240, 10240
      %17 = vsyncadd [#allocation4], %s16
      %s18 = sshll.u32 [#allocation3], 4
      %s19 = int_to_ptr.vmem [resolvable:$true] %s18
      %24 = dma.hbm_to_vmem [thread:$0]  %s1, 10240, %s19, [#allocation4], 512, 512, 32
    $region9: #{tpu_custom_call.1} parent=1 // pred_fallthru
      _
    // Predicated region
    $region10: #{tpu_custom_call.1} parent=1 // pred_check
      _
    $region11: #{tpu_custom_call.1} parent=1 // pred_check_branch
      %26 = sbr.rel (0) target = $region13
    $region12: #{tpu_custom_call.1} parent=1 // pred_region
      %s28 = ssub.s32 2176, 2176
      %29 = vsyncadd [#allocation7], %s28
      %s30 = sshll.u32 [#allocation6], 4
      %s31 = int_to_ptr.vmem [resolvable:$true] %s30
      %36 = dma.hbm_to_vmem [thread:$0]  %s2, 2176, %s31, [#allocation7], 128, 128, 8
    $region13: #{tpu_custom_call.1} parent=1 // pred_fallthru
      _
    // Predicated region
    $region14: #{tpu_custom_call.1} parent=1 // pred_check
      _
    $region15: #{tpu_custom_call.1} parent=1 // pred_check_branch
      %38 = sbr.rel (0) target = $region17
    $region16: #{tpu_custom_call.1} parent=1 // pred_region
      %39 = dma.done [#allocation4], 10240
    $region17: #{tpu_custom_call.1} parent=1 // pred_fallthru
      _
    // Predicated region
    $region18: #{tpu_custom_call.1} parent=1 // pred_check
      _
    $region19: #{tpu_custom_call.1} parent=1 // pred_check_branch
      %41 = sbr.rel (0) target = $region21
    $region20: #{tpu_custom_call.1} parent=1 // pred_region
      %42 = dma.done [#allocation7], 2176
    $region21: #{tpu_custom_call.1} parent=1 // pred_fallthru
      _
    %v43 = vld [vmem:[%s0] sm:$0xff]
    %v44 = vld [vmem:[%s0 + $0x8] sm:$0xff]
    %v45 = vld [vmem:[%s0 + $0x10] sm:$0xff]
    %v46 = vld [vmem:[%s0 + $0x18] sm:$0xff]
    %v47 = vld [vmem:[%s0 + $0x20] sm:$0xff]
    %v48 = vld [vmem:[%s0 + $0x28] sm:$0xff]
    %v49 = vld [vmem:[%s0 + $0x30] sm:$0xff]
    %v50 = vld [vmem:[%s0 + $0x38] sm:$0xff]
    %v51 = vld [vmem:[#allocation3] sm:$0xff]
    %v52 = vld [vmem:[#allocation3 + $0x8] sm:$0xff]
    %v53 = vld [vmem:[#allocation3 + $0x10] sm:$0xff]
    %v54 = vld [vmem:[#allocation3 + $0x18] sm:$0xff]
    %v55 = vld [vmem:[#allocation3 + $0x20] sm:$0xff]
    %v56 = vld [vmem:[#allocation3 + $0x28] sm:$0xff]
    %v57 = vld [vmem:[#allocation3 + $0x30] sm:$0xff]
    %v58 = vld [vmem:[#allocation3 + $0x38] sm:$0xff]
    %v59 = vld [vmem:[#allocation3 + $0x40] sm:$0xff]
    %v60 = vld [vmem:[#allocation3 + $0x48] sm:$0xff]
    %v61 = vld [vmem:[#allocation3 + $0x50] sm:$0xff]
    %v62 = vld [vmem:[#allocation3 + $0x58] sm:$0xff]
    %v63 = vld [vmem:[#allocation3 + $0x60] sm:$0xff]
    %v64 = vld [vmem:[#allocation3 + $0x68] sm:$0xff]
    %v65 = vld [vmem:[#allocation3 + $0x70] sm:$0xff]
    %v66 = vld [vmem:[#allocation3 + $0x78] sm:$0xff]
    %vm67 = vcmask 261120
    %v69 = vsel %vm67, %v43, 0
    %v72 = vsel %vm67, %v44, 0
    %v75 = vsel %vm67, %v45, 0
    %v78 = vsel %vm67, %v46, 0
    %v81 = vsel %vm67, %v47, 0
    %v84 = vsel %vm67, %v48, 0
    %v87 = vsel %vm67, %v49, 0
    %v90 = vsel %vm67, %v50, 0
    %92 = vmatprep.subr.mxu0 0.0
    %93 = vmatpush1.msra.mxu0 0.0
    %94 = vmatprep.subr.mxu0 0.0
    %95 = vmatpush1.msra.mxu0 0.0
    %96 = vmatprep.subr.mxu0 0.0
    %97 = vmatpush1.msra.mxu0 0.0
    %98 = vmatprep.subr.mxu0 0.0
    %99 = vmatpush1.msra.mxu0 0.0
    %100 = vmatprep.subr.mxu0 0.0
    %101 = vmatpush1.msra.mxu0 0.0
    %102 = vmatprep.subr.mxu0 0.0
    %103 = vmatpush1.msra.mxu0 0.0
    %104 = vmatprep.subr.mxu0 0.0
    %105 = vmatpush1.msra.mxu0 0.0
    %106 = vmatprep.subr.mxu0 0.0
    %107 = vmatpush1.msra.mxu0 0.0
    %108 = vmatprep.subr.mxu0 0.0
    %109 = vmatpush1.msra.mxu0 0.0
    %110 = vmatprep.subr.mxu0 0.0
    %111 = vmatpush1.msra.mxu0 0.0
    %112 = vmatprep.subr.mxu0 0.0
    %113 = vmatpush1.msra.mxu0 0.0
    %114 = vmatprep.subr.mxu0 0.0
    %115 = vmatpush1.msra.mxu0 0.0
    %116 = vmatprep.subr.mxu0 %v64
    %117 = vmatpush1.msra.mxu0 %v63
    %118 = vmatprep.subr.mxu0 %v60
    %119 = vmatpush1.msra.mxu0 %v59
    %120 = vmatprep.subr.mxu0 %v56
    %121 = vmatpush1.msra.mxu0 %v55
    %122 = vmatprep.subr.mxu0 %v52
    %123 = vmatpush1.msra.mxu0 %v51
    %124 = vmatprep.subr.mxu0 0.0
    %125 = vmatpush2.msra.mxu0 0.0
    %126 = vmatprep.subr.mxu0 0.0
    %127 = vmatpush2.msra.mxu0 0.0
    %128 = vmatprep.subr.mxu0 0.0
    %129 = vmatpush2.msra.mxu0 0.0
    %130 = vmatprep.subr.mxu0 0.0
    %131 = vmatpush2.msra.mxu0 0.0
    %132 = vmatprep.subr.mxu0 0.0
    %133 = vmatpush2.msra.mxu0 0.0
    %134 = vmatprep.subr.mxu0 0.0
    %135 = vmatpush2.msra.mxu0 0.0
    %136 = vmatprep.subr.mxu0 0.0
    %137 = vmatpush2.msra.mxu0 0.0
    %138 = vmatprep.subr.mxu0 0.0
    %139 = vmatpush2.msra.mxu0 0.0
    %140 = vmatprep.subr.mxu0 0.0
    %141 = vmatpush2.msra.mxu0 0.0
    %142 = vmatprep.subr.mxu0 0.0
    %143 = vmatpush2.msra.mxu0 0.0
    %144 = vmatprep.subr.mxu0 0.0
    %145 = vmatpush2.msra.mxu0 0.0
    %146 = vmatprep.subr.mxu0 0.0
    %147 = vmatpush2.msra.mxu0 0.0
    %148 = vmatprep.subr.mxu0 0.0
    %149 = vmatpush2.msra.mxu0 0.0
    %150 = vmatprep.subr.mxu0 0.0
    %151 = vmatpush2.msra.mxu0 0.0
    %152 = vmatprep.subr.mxu0 0.0
    %153 = vmatpush2.msra.mxu0 0.0
    %154 = vmatprep.subr.mxu0 0.0
    %155 = vmatpush2.msra.mxu0 0.0
    %156 = vmatprep.mubr.f32.mxu0 0.0
    %157 = vmatmul.mubr.f32.gmra.mxu0 %v69
    %v158 = vpop.f32.mrf.mxu0
    %v159 = vadd.f32 0.0, %v158
    %v160 = vpop.f32.mrf.mxu0
    %v161 = vadd.f32 0.0, %v160
    %162 = vmatprep.mubr.f32.mxu0 0.0
    %163 = vmatmul.mubr.f32.gmra.mxu0 %v72
    %v164 = vpop.f32.mrf.mxu0
    %v165 = vadd.f32 0.0, %v164
    %v166 = vpop.f32.mrf.mxu0
    %v167 = vadd.f32 0.0, %v166
    %168 = vmatprep.mubr.f32.mxu0 0.0
    %169 = vmatmul.mubr.f32.gmra.mxu0 %v75
    %v170 = vpop.f32.mrf.mxu0
    %v171 = vadd.f32 0.0, %v170
    %v172 = vpop.f32.mrf.mxu0
    %v173 = vadd.f32 0.0, %v172
    %174 = vmatprep.mubr.f32.mxu0 0.0
    %175 = vmatmul.mubr.f32.gmra.mxu0 %v78
    %v176 = vpop.f32.mrf.mxu0
    %v177 = vadd.f32 0.0, %v176
    %v178 = vpop.f32.mrf.mxu0
    %v179 = vadd.f32 0.0, %v178
    %180 = vmatprep.mubr.f32.mxu0 0.0
    %181 = vmatmul.mubr.f32.gmra.mxu0 %v81
    %v182 = vpop.f32.mrf.mxu0
    %v183 = vadd.f32 0.0, %v182
    %v184 = vpop.f32.mrf.mxu0
    %v185 = vadd.f32 0.0, %v184
    %186 = vmatprep.mubr.f32.mxu0 0.0
    %187 = vmatmul.mubr.f32.gmra.mxu0 %v84
    %v188 = vpop.f32.mrf.mxu0
    %v189 = vadd.f32 0.0, %v188
    %v190 = vpop.f32.mrf.mxu0
    %v191 = vadd.f32 0.0, %v190
    %192 = vmatprep.mubr.f32.mxu0 0.0
    %193 = vmatmul.mubr.f32.gmra.mxu0 %v87
    %v194 = vpop.f32.mrf.mxu0
    %v195 = vadd.f32 0.0, %v194
    %v196 = vpop.f32.mrf.mxu0
    %v197 = vadd.f32 0.0, %v196
    %198 = vmatprep.mubr.f32.mxu0 0.0
    %199 = vmatmul.mubr.f32.gmra.mxu0 %v90
    %v200 = vpop.f32.mrf.mxu0
    %v201 = vadd.f32 0.0, %v200
    %v202 = vpop.f32.mrf.mxu0
    %v203 = vadd.f32 0.0, %v202
    %204 = vdwg.mxu0
    %205 = vmatprep.subr.mxu0 0.0
    %206 = vmatpush1.msra.mxu0 0.0
    %207 = vmatprep.subr.mxu0 0.0
    %208 = vmatpush1.msra.mxu0 0.0
    %209 = vmatprep.subr.mxu0 0.0
    %210 = vmatpush1.msra.mxu0 0.0
    %211 = vmatprep.subr.mxu0 0.0
    %212 = vmatpush1.msra.mxu0 0.0
    %213 = vmatprep.subr.mxu0 0.0
    %214 = vmatpush1.msra.mxu0 0.0
    %215 = vmatprep.subr.mxu0 0.0
    %216 = vmatpush1.msra.mxu0 0.0
    %217 = vmatprep.subr.mxu0 0.0
    %218 = vmatpush1.msra.mxu0 0.0
    %219 = vmatprep.subr.mxu0 0.0
    %220 = vmatpush1.msra.mxu0 0.0
    %221 = vmatprep.subr.mxu0 0.0
    %222 = vmatpush1.msra.mxu0 0.0
    %223 = vmatprep.subr.mxu0 0.0
    %224 = vmatpush1.msra.mxu0 0.0
    %225 = vmatprep.subr.mxu0 0.0
    %226 = vmatpush1.msra.mxu0 0.0
    %227 = vmatprep.subr.mxu0 0.0
    %228 = vmatpush1.msra.mxu0 0.0
    %229 = vmatprep.subr.mxu0 %v66
    %230 = vmatpush1.msra.mxu0 %v65
    %231 = vmatprep.subr.mxu0 %v62
    %232 = vmatpush1.msra.mxu0 %v61
    %233 = vmatprep.subr.mxu0 %v58
    %234 = vmatpush1.msra.mxu0 %v57
    %235 = vmatprep.subr.mxu0 %v54
    %236 = vmatpush1.msra.mxu0 %v53
    %237 = vmatprep.subr.mxu0 0.0
    %238 = vmatpush2.msra.mxu0 0.0
    %239 = vmatprep.subr.mxu0 0.0
    %240 = vmatpush2.msra.mxu0 0.0
    %241 = vmatprep.subr.mxu0 0.0
    %242 = vmatpush2.msra.mxu0 0.0
    %243 = vmatprep.subr.mxu0 0.0
    %244 = vmatpush2.msra.mxu0 0.0
    %245 = vmatprep.subr.mxu0 0.0
    %246 = vmatpush2.msra.mxu0 0.0
    %247 = vmatprep.subr.mxu0 0.0
    %248 = vmatpush2.msra.mxu0 0.0
    %249 = vmatprep.subr.mxu0 0.0
    %250 = vmatpush2.msra.mxu0 0.0
    %251 = vmatprep.subr.mxu0 0.0
    %252 = vmatpush2.msra.mxu0 0.0
    %253 = vmatprep.subr.mxu0 0.0
    %254 = vmatpush2.msra.mxu0 0.0
    %255 = vmatprep.subr.mxu0 0.0
    %256 = vmatpush2.msra.mxu0 0.0
    %257 = vmatprep.subr.mxu0 0.0
    %258 = vmatpush2.msra.mxu0 0.0
    %259 = vmatprep.subr.mxu0 0.0
    %260 = vmatpush2.msra.mxu0 0.0
    %261 = vmatprep.subr.mxu0 0.0
    %262 = vmatpush2.msra.mxu0 0.0
    %263 = vmatprep.subr.mxu0 0.0
    %264 = vmatpush2.msra.mxu0 0.0
    %265 = vmatprep.subr.mxu0 0.0
    %266 = vmatpush2.msra.mxu0 0.0
    %267 = vmatprep.subr.mxu0 0.0
    %268 = vmatpush2.msra.mxu0 0.0
    %269 = vmatprep.mubr.f32.mxu0 0.0
    %270 = vmatmul.mubr.f32.gmra.mxu0 %v69
    %v271 = vpop.f32.mrf.mxu0
    %v272 = vadd.f32 0.0, %v271
    %v273 = vpop.f32.mrf.mxu0
    %v274 = vadd.f32 0.0, %v273
    %275 = vmatprep.mubr.f32.mxu0 0.0
    %276 = vmatmul.mubr.f32.gmra.mxu0 %v72
    %v277 = vpop.f32.mrf.mxu0
    %v278 = vadd.f32 0.0, %v277
    %v279 = vpop.f32.mrf.mxu0
    %v280 = vadd.f32 0.0, %v279
    %281 = vmatprep.mubr.f32.mxu0 0.0
    %282 = vmatmul.mubr.f32.gmra.mxu0 %v75
    %v283 = vpop.f32.mrf.mxu0
    %v284 = vadd.f32 0.0, %v283
    %v285 = vpop.f32.mrf.mxu0
    %v286 = vadd.f32 0.0, %v285
    %287 = vmatprep.mubr.f32.mxu0 0.0
    %288 = vmatmul.mubr.f32.gmra.mxu0 %v78
    %v289 = vpop.f32.mrf.mxu0
    %v290 = vadd.f32 0.0, %v289
    %v291 = vpop.f32.mrf.mxu0
    %v292 = vadd.f32 0.0, %v291
    %293 = vmatprep.mubr.f32.mxu0 0.0
    %294 = vmatmul.mubr.f32.gmra.mxu0 %v81
    %v295 = vpop.f32.mrf.mxu0
    %v296 = vadd.f32 0.0, %v295
    %v297 = vpop.f32.mrf.mxu0
    %v298 = vadd.f32 0.0, %v297
    %299 = vmatprep.mubr.f32.mxu0 0.0
    %300 = vmatmul.mubr.f32.gmra.mxu0 %v84
    %v301 = vpop.f32.mrf.mxu0
    %v302 = vadd.f32 0.0, %v301
    %v303 = vpop.f32.mrf.mxu0
    %v304 = vadd.f32 0.0, %v303
    %305 = vmatprep.mubr.f32.mxu0 0.0
    %306 = vmatmul.mubr.f32.gmra.mxu0 %v87
    %v307 = vpop.f32.mrf.mxu0
    %v308 = vadd.f32 0.0, %v307
    %v309 = vpop.f32.mrf.mxu0
    %v310 = vadd.f32 0.0, %v309
    %311 = vmatprep.mubr.f32.mxu0 0.0
    %312 = vmatmul.mubr.f32.gmra.mxu0 %v90
    %v313 = vpop.f32.mrf.mxu0
    %v314 = vadd.f32 0.0, %v313
    %v315 = vpop.f32.mrf.mxu0
    %v316 = vadd.f32 0.0, %v315
    %317 = vdwg.mxu0
    %318 = vst [vmem:[#allocation2] sm:$0xff] %v159
    %319 = vst [vmem:[#allocation2 + $0x8] sm:$0xff] %v161
    %320 = vst [vmem:[#allocation2 + $0x10] sm:$0xff] %v272
    %321 = vst [vmem:[#allocation2 + $0x18] sm:$0xff] %v274
    %322 = vst [vmem:[#allocation2 + $0x20] sm:$0xff] %v165
    %323 = vst [vmem:[#allocation2 + $0x28] sm:$0xff] %v167
    %324 = vst [vmem:[#allocation2 + $0x30] sm:$0xff] %v278
    %325 = vst [vmem:[#allocation2 + $0x38] sm:$0xff] %v280
    %326 = vst [vmem:[#allocation2 + $0x40] sm:$0xff] %v171
    %327 = vst [vmem:[#allocation2 + $0x48] sm:$0xff] %v173
    %328 = vst [vmem:[#allocation2 + $0x50] sm:$0xff] %v284
    %329 = vst [vmem:[#allocation2 + $0x58] sm:$0xff] %v286
    %330 = vst [vmem:[#allocation2 + $0x60] sm:$0xff] %v177
    %331 = vst [vmem:[#allocation2 + $0x68] sm:$0xff] %v179
    %332 = vst [vmem:[#allocation2 + $0x70] sm:$0xff] %v290
    %333 = vst [vmem:[#allocation2 + $0x78] sm:$0xff] %v292
    %334 = vst [vmem:[#allocation2 + $0x80] sm:$0xff] %v183
    %335 = vst [vmem:[#allocation2 + $0x88] sm:$0xff] %v185
    %336 = vst [vmem:[#allocation2 + $0x90] sm:$0xff] %v296
    %337 = vst [vmem:[#allocation2 + $0x98] sm:$0xff] %v298
    %338 = vst [vmem:[#allocation2 + $0xa0] sm:$0xff] %v189
    %339 = vst [vmem:[#allocation2 + $0xa8] sm:$0xff] %v191
    %340 = vst [vmem:[#allocation2 + $0xb0] sm:$0xff] %v302
    %341 = vst [vmem:[#allocation2 + $0xb8] sm:$0xff] %v304
    %342 = vst [vmem:[#allocation2 + $0xc0] sm:$0xff] %v195
    %343 = vst [vmem:[#allocation2 + $0xc8] sm:$0xff] %v197
    %344 = vst [vmem:[#allocation2 + $0xd0] sm:$0xff] %v308
    %345 = vst [vmem:[#allocation2 + $0xd8] sm:$0xff] %v310
    %346 = vst [vmem:[#allocation2 + $0xe0] sm:$0xff] %v201
    %347 = vst [vmem:[#allocation2 + $0xe8] sm:$0xff] %v203
    %348 = vst [vmem:[#allocation2 + $0xf0] sm:$0xff] %v314
    %349 = vst [vmem:[#allocation2 + $0xf8] sm:$0xff] %v316
    %v350 = vld [vmem:[#allocation3 + $0x80] sm:$0xff]
    %v351 = vld [vmem:[#allocation3 + $0x88] sm:$0xff]
    %v352 = vld [vmem:[#allocation3 + $0x90] sm:$0xff]
    %v353 = vld [vmem:[#allocation3 + $0x98] sm:$0xff]
    %v354 = vld [vmem:[#allocation3 + $0xa0] sm:$0xff]
    %v355 = vld [vmem:[#allocation3 + $0xa8] sm:$0xff]
    %v356 = vld [vmem:[#allocation3 + $0xb0] sm:$0xff]
    %v357 = vld [vmem:[#allocation3 + $0xb8] sm:$0xff]
    %v358 = vld [vmem:[#allocation3 + $0xc0] sm:$0xff]
    %v359 = vld [vmem:[#allocation3 + $0xc8] sm:$0xff]
    %v360 = vld [vmem:[#allocation3 + $0xd0] sm:$0xff]
    %v361 = vld [vmem:[#allocation3 + $0xd8] sm:$0xff]
    %v362 = vld [vmem:[#allocation3 + $0xe0] sm:$0xff]
    %v363 = vld [vmem:[#allocation3 + $0xe8] sm:$0xff]
    %v364 = vld [vmem:[#allocation3 + $0xf0] sm:$0xff]
    %v365 = vld [vmem:[#allocation3 + $0xf8] sm:$0xff]
    %v366 = vld [vmem:[#allocation3 + $0x100] sm:$0xff]
    %v367 = vld [vmem:[#allocation3 + $0x108] sm:$0xff]
    %v368 = vld [vmem:[#allocation3 + $0x110] sm:$0xff]
    %v369 = vld [vmem:[#allocation3 + $0x118] sm:$0xff]
    %v370 = vld [vmem:[#allocation3 + $0x120] sm:$0xff]
    %v371 = vld [vmem:[#allocation3 + $0x128] sm:$0xff]
    %v372 = vld [vmem:[#allocation3 + $0x130] sm:$0xff]
    %v373 = vld [vmem:[#allocation3 + $0x138] sm:$0xff]
    %v374 = vld [vmem:[#allocation3 + $0x140] sm:$0xff]
    %v375 = vld [vmem:[#allocation3 + $0x148] sm:$0xff]
    %v376 = vld [vmem:[#allocation3 + $0x150] sm:$0xff]
    %v377 = vld [vmem:[#allocation3 + $0x158] sm:$0xff]
    %v378 = vld [vmem:[#allocation3 + $0x160] sm:$0xff]
    %v379 = vld [vmem:[#allocation3 + $0x168] sm:$0xff]
    %v380 = vld [vmem:[#allocation3 + $0x170] sm:$0xff]
    %v381 = vld [vmem:[#allocation3 + $0x178] sm:$0xff]
    %v382 = vld [vmem:[#allocation3 + $0x180] sm:$0xff]
    %v383 = vld [vmem:[#allocation3 + $0x188] sm:$0xff]
    %v384 = vld [vmem:[#allocation3 + $0x190] sm:$0xff]
    %v385 = vld [vmem:[#allocation3 + $0x198] sm:$0xff]
    %v386 = vld [vmem:[#allocation3 + $0x1a0] sm:$0xff]
    %v387 = vld [vmem:[#allocation3 + $0x1a8] sm:$0xff]
    %v388 = vld [vmem:[#allocation3 + $0x1b0] sm:$0xff]
    %v389 = vld [vmem:[#allocation3 + $0x1b8] sm:$0xff]
    %v390 = vld [vmem:[#allocation3 + $0x1c0] sm:$0xff]
    %v391 = vld [vmem:[#allocation3 + $0x1c8] sm:$0xff]
    %v392 = vld [vmem:[#allocation3 + $0x1d0] sm:$0xff]
    %v393 = vld [vmem:[#allocation3 + $0x1d8] sm:$0xff]
    %v394 = vld [vmem:[#allocation3 + $0x1e0] sm:$0xff]
    %v395 = vld [vmem:[#allocation3 + $0x1e8] sm:$0xff]
    %v396 = vld [vmem:[#allocation3 + $0x1f0] sm:$0xff]
    %v397 = vld [vmem:[#allocation3 + $0x1f8] sm:$0xff]
    %v398 = vld [vmem:[#allocation3 + $0x200] sm:$0xff]
    %v399 = vld [vmem:[#allocation3 + $0x208] sm:$0xff]
    %v400 = vld [vmem:[#allocation3 + $0x210] sm:$0xff]
    %v401 = vld [vmem:[#allocation3 + $0x218] sm:$0xff]
    %v402 = vld [vmem:[#allocation3 + $0x220] sm:$0xff]
    %v403 = vld [vmem:[#allocation3 + $0x228] sm:$0xff]
    %v404 = vld [vmem:[#allocation3 + $0x230] sm:$0xff]
    %v405 = vld [vmem:[#allocation3 + $0x238] sm:$0xff]
    %v406 = vld [vmem:[#allocation3 + $0x240] sm:$0xff]
    %v407 = vld [vmem:[#allocation3 + $0x248] sm:$0xff]
    %v408 = vld [vmem:[#allocation3 + $0x250] sm:$0xff]
    %v409 = vld [vmem:[#allocation3 + $0x258] sm:$0xff]
    %v410 = vld [vmem:[#allocation3 + $0x260] sm:$0xff]
    %v411 = vld [vmem:[#allocation3 + $0x268] sm:$0xff]
    %v412 = vld [vmem:[#allocation3 + $0x270] sm:$0xff]
    %v413 = vld [vmem:[#allocation3 + $0x278] sm:$0xff]
    %v414 = vld [vmem:[#allocation2] sm:$0xff]
    %v415 = vld [vmem:[#allocation2 + $0x10] sm:$0xff]
    %v416 = vld [vmem:[#allocation2 + $0x18] sm:$0xff]
    %v417 = vtanh.pop %v414
    %v418 = vtanh.pop %v415
    %v419 = vtanh.pop %v416
    %v420 = vmul.f32 %v417, 0.5
    %v421 = vadd.f32 %v420, 0.5
    %v422 = vmul.f32 %v419, 0.5
    %v423 = vadd.f32 %v422, 0.5
    %v424 = vmul.f32 %v421, %v418
    %v425 = vtanh.pop %v424
    %v426 = vmul.f32 %v423, %v425
    %v427 = vld [vmem:[#allocation2 + $0x20] sm:$0xff]
    %v428 = vld [vmem:[#allocation2 + $0x28] sm:$0xff]
    %v429 = vld [vmem:[#allocation2 + $0x30] sm:$0xff]
    %v430 = vld [vmem:[#allocation2 + $0x38] sm:$0xff]
    %431 = vmatprep.subr.mxu0 %v411
    %432 = vmatpush1.msra.mxu0 %v410
    %433 = vmatprep.subr.mxu0 %v407
    %434 = vmatpush1.msra.mxu0 %v406
    %435 = vmatprep.subr.mxu0 %v403
    %436 = vmatpush1.msra.mxu0 %v402
    %437 = vmatprep.subr.mxu0 %v399
    %438 = vmatpush1.msra.mxu0 %v398
    %439 = vmatprep.subr.mxu0 %v395
    %440 = vmatpush1.msra.mxu0 %v394
    %441 = vmatprep.subr.mxu0 %v391
    %442 = vmatpush1.msra.mxu0 %v390
    %443 = vmatprep.subr.mxu0 %v387
    %444 = vmatpush1.msra.mxu0 %v386
    %445 = vmatprep.subr.mxu0 %v383
    %446 = vmatpush1.msra.mxu0 %v382
    %447 = vmatprep.subr.mxu0 %v379
    %448 = vmatpush1.msra.mxu0 %v378
    %449 = vmatprep.subr.mxu0 %v375
    %450 = vmatpush1.msra.mxu0 %v374
    %451 = vmatprep.subr.mxu0 %v371
    %452 = vmatpush1.msra.mxu0 %v370
    %453 = vmatprep.subr.mxu0 %v367
    %454 = vmatpush1.msra.mxu0 %v366
    %455 = vmatprep.subr.mxu0 %v363
    %456 = vmatpush1.msra.mxu0 %v362
    %457 = vmatprep.subr.mxu0 %v359
    %458 = vmatpush1.msra.mxu0 %v358
    %459 = vmatprep.subr.mxu0 %v355
    %460 = vmatpush1.msra.mxu0 %v354
    %461 = vmatprep.subr.mxu0 %v351
    %462 = vmatpush1.msra.mxu0 %v350
    %463 = vmatprep.subr.mxu0 0.0
    %464 = vmatpush2.msra.mxu0 0.0
    %465 = vmatprep.subr.mxu0 0.0
    %466 = vmatpush2.msra.mxu0 0.0
    %467 = vmatprep.subr.mxu0 0.0
    %468 = vmatpush2.msra.mxu0 0.0
    %469 = vmatprep.subr.mxu0 0.0
    %470 = vmatpush2.msra.mxu0 0.0
    %471 = vmatprep.subr.mxu0 0.0
    %472 = vmatpush2.msra.mxu0 0.0
    %473 = vmatprep.subr.mxu0 0.0
    %474 = vmatpush2.msra.mxu0 0.0
    %475 = vmatprep.subr.mxu0 0.0
    %476 = vmatpush2.msra.mxu0 0.0
    %477 = vmatprep.subr.mxu0 0.0
    %478 = vmatpush2.msra.mxu0 0.0
    %479 = vmatprep.subr.mxu0 0.0
    %480 = vmatpush2.msra.mxu0 0.0
    %481 = vmatprep.subr.mxu0 0.0
    %482 = vmatpush2.msra.mxu0 0.0
    %483 = vmatprep.subr.mxu0 0.0
    %484 = vmatpush2.msra.mxu0 0.0
    %485 = vmatprep.subr.mxu0 0.0
    %486 = vmatpush2.msra.mxu0 0.0
    %487 = vmatprep.subr.mxu0 0.0
    %488 = vmatpush2.msra.mxu0 0.0
    %489 = vmatprep.subr.mxu0 0.0
    %490 = vmatpush2.msra.mxu0 0.0
    %491 = vmatprep.subr.mxu0 0.0
    %492 = vmatpush2.msra.mxu0 0.0
    %493 = vmatprep.subr.mxu0 0.0
    %494 = vmatpush2.msra.mxu0 0.0
    %495 = vmatprep.mubr.f32.mxu0 0.0
    %496 = vmatmul.mubr.f32.gmra.mxu0 %v426
    %v497 = vpop.f32.mrf.mxu0
    %v498 = vadd.f32 0.0, %v497
    %v499 = vpop.f32.mrf.mxu0
    %v500 = vadd.f32 0.0, %v499
    %501 = vdwg.mxu0
    %502 = vmatprep.subr.mxu0 %v413
    %503 = vmatpush1.msra.mxu0 %v412
    %504 = vmatprep.subr.mxu0 %v409
    %505 = vmatpush1.msra.mxu0 %v408
    %506 = vmatprep.subr.mxu0 %v405
    %507 = vmatpush1.msra.mxu0 %v404
    %508 = vmatprep.subr.mxu0 %v401
    %509 = vmatpush1.msra.mxu0 %v400
    %510 = vmatprep.subr.mxu0 %v397
    %511 = vmatpush1.msra.mxu0 %v396
    %512 = vmatprep.subr.mxu0 %v393
    %513 = vmatpush1.msra.mxu0 %v392
    %514 = vmatprep.subr.mxu0 %v389
    %515 = vmatpush1.msra.mxu0 %v388
    %516 = vmatprep.subr.mxu0 %v385
    %517 = vmatpush1.msra.mxu0 %v384
    %518 = vmatprep.subr.mxu0 %v381
    %519 = vmatpush1.msra.mxu0 %v380
    %520 = vmatprep.subr.mxu0 %v377
    %521 = vmatpush1.msra.mxu0 %v376
    %522 = vmatprep.subr.mxu0 %v373
    %523 = vmatpush1.msra.mxu0 %v372
    %524 = vmatprep.subr.mxu0 %v369
    %525 = vmatpush1.msra.mxu0 %v368
    %526 = vmatprep.subr.mxu0 %v365
    %527 = vmatpush1.msra.mxu0 %v364
    %528 = vmatprep.subr.mxu0 %v361
    %529 = vmatpush1.msra.mxu0 %v360
    %530 = vmatprep.subr.mxu0 %v357
    %531 = vmatpush1.msra.mxu0 %v356
    %532 = vmatprep.subr.mxu0 %v353
    %533 = vmatpush1.msra.mxu0 %v352
    %534 = vmatprep.subr.mxu0 0.0
    %535 = vmatpush2.msra.mxu0 0.0
    %536 = vmatprep.subr.mxu0 0.0
    %537 = vmatpush2.msra.mxu0 0.0
    %538 = vmatprep.subr.mxu0 0.0
    %539 = vmatpush2.msra.mxu0 0.0
    %540 = vmatprep.subr.mxu0 0.0
    %541 = vmatpush2.msra.mxu0 0.0
    %542 = vmatprep.subr.mxu0 0.0
    %543 = vmatpush2.msra.mxu0 0.0
    %544 = vmatprep.subr.mxu0 0.0
    %545 = vmatpush2.msra.mxu0 0.0
    %546 = vmatprep.subr.mxu0 0.0
    %547 = vmatpush2.msra.mxu0 0.0
    %548 = vmatprep.subr.mxu0 0.0
    %549 = vmatpush2.msra.mxu0 0.0
    %550 = vmatprep.subr.mxu0 0.0
    %551 = vmatpush2.msra.mxu0 0.0
    %552 = vmatprep.subr.mxu0 0.0
    %553 = vmatpush2.msra.mxu0 0.0
    %554 = vmatprep.subr.mxu0 0.0
    %555 = vmatpush2.msra.mxu0 0.0
    %556 = vmatprep.subr.mxu0 0.0
    %557 = vmatpush2.msra.mxu0 0.0
    %558 = vmatprep.subr.mxu0 0.0
    %559 = vmatpush2.msra.mxu0 0.0
    %560 = vmatprep.subr.mxu0 0.0
    %561 = vmatpush2.msra.mxu0 0.0
    %562 = vmatprep.subr.mxu0 0.0
    %563 = vmatpush2.msra.mxu0 0.0
    %564 = vmatprep.subr.mxu0 0.0
    %565 = vmatpush2.msra.mxu0 0.0
    %566 = vmatprep.mubr.f32.mxu0 0.0
    %567 = vmatmul.mubr.f32.gmra.mxu0 %v426
    %v568 = vpop.f32.mrf.mxu0
    %v569 = vadd.f32 0.0, %v568
    %v570 = vpop.f32.mrf.mxu0
    %v571 = vadd.f32 0.0, %v570
    %572 = vdwg.mxu0
    %v573 = vadd.f32 %v427, %v498
    %v574 = vadd.f32 %v428, %v500
    %v575 = vadd.f32 %v429, %v569
    %v576 = vadd.f32 %v430, %v571
    %v577 = vtanh.pop %v573
    %v578 = vtanh.pop %v574
    %v579 = vtanh.pop %v575
    %v580 = vtanh.pop %v576
    %v581 = vmul.f32 %v577, 0.5
    %v582 = vadd.f32 %v581, 0.5
    %v583 = vmul.f32 %v578, 0.5
    %v584 = vadd.f32 %v583, 0.5
    %v585 = vmul.f32 %v580, 0.5
    %v586 = vadd.f32 %v585, 0.5
    %v587 = vmul.f32 %v584, %v424
    %v588 = vmul.f32 %v582, %v579
    %v589 = vadd.f32 %v587, %v588
    %v590 = vtanh.pop %v589
    %v591 = vmul.f32 %v586, %v590
    %v592 = vld [vmem:[#allocation2 + $0x40] sm:$0xff]
    %v593 = vld [vmem:[#allocation2 + $0x48] sm:$0xff]
    %v594 = vld [vmem:[#allocation2 + $0x50] sm:$0xff]
    %v595 = vld [vmem:[#allocation2 + $0x58] sm:$0xff]
    %596 = vmatprep.subr.mxu0 %v411
    %597 = vmatpush1.msra.mxu0 %v410
    %598 = vmatprep.subr.mxu0 %v407
    %599 = vmatpush1.msra.mxu0 %v406
    %600 = vmatprep.subr.mxu0 %v403
    %601 = vmatpush1.msra.mxu0 %v402
    %602 = vmatprep.subr.mxu0 %v399
    %603 = vmatpush1.msra.mxu0 %v398
    %604 = vmatprep.subr.mxu0 %v395
    %605 = vmatpush1.msra.mxu0 %v394
    %606 = vmatprep.subr.mxu0 %v391
    %607 = vmatpush1.msra.mxu0 %v390
    %608 = vmatprep.subr.mxu0 %v387
    %609 = vmatpush1.msra.mxu0 %v386
    %610 = vmatprep.subr.mxu0 %v383
    %611 = vmatpush1.msra.mxu0 %v382
    %612 = vmatprep.subr.mxu0 %v379
    %613 = vmatpush1.msra.mxu0 %v378
    %614 = vmatprep.subr.mxu0 %v375
    %615 = vmatpush1.msra.mxu0 %v374
    %616 = vmatprep.subr.mxu0 %v371
    %617 = vmatpush1.msra.mxu0 %v370
    %618 = vmatprep.subr.mxu0 %v367
    %619 = vmatpush1.msra.mxu0 %v366
    %620 = vmatprep.subr.mxu0 %v363
    %621 = vmatpush1.msra.mxu0 %v362
    %622 = vmatprep.subr.mxu0 %v359
    %623 = vmatpush1.msra.mxu0 %v358
    %624 = vmatprep.subr.mxu0 %v355
    %625 = vmatpush1.msra.mxu0 %v354
    %626 = vmatprep.subr.mxu0 %v351
    %627 = vmatpush1.msra.mxu0 %v350
    %628 = vmatprep.subr.mxu0 0.0
    %629 = vmatpush2.msra.mxu0 0.0
    %630 = vmatprep.subr.mxu0 0.0
    %631 = vmatpush2.msra.mxu0 0.0
    %632 = vmatprep.subr.mxu0 0.0
    %633 = vmatpush2.msra.mxu0 0.0
    %634 = vmatprep.subr.mxu0 0.0
    %635 = vmatpush2.msra.mxu0 0.0
    %636 = vmatprep.subr.mxu0 0.0
    %637 = vmatpush2.msra.mxu0 0.0
    %638 = vmatprep.subr.mxu0 0.0
    %639 = vmatpush2.msra.mxu0 0.0
    %640 = vmatprep.subr.mxu0 0.0
    %641 = vmatpush2.msra.mxu0 0.0
    %642 = vmatprep.subr.mxu0 0.0
    %643 = vmatpush2.msra.mxu0 0.0
    %644 = vmatprep.subr.mxu0 0.0
    %645 = vmatpush2.msra.mxu0 0.0
    %646 = vmatprep.subr.mxu0 0.0
    %647 = vmatpush2.msra.mxu0 0.0
    %648 = vmatprep.subr.mxu0 0.0
    %649 = vmatpush2.msra.mxu0 0.0
    %650 = vmatprep.subr.mxu0 0.0
    %651 = vmatpush2.msra.mxu0 0.0
    %652 = vmatprep.subr.mxu0 0.0
    %653 = vmatpush2.msra.mxu0 0.0
    %654 = vmatprep.subr.mxu0 0.0
    %655 = vmatpush2.msra.mxu0 0.0
    %656 = vmatprep.subr.mxu0 0.0
    %657 = vmatpush2.msra.mxu0 0.0
    %658 = vmatprep.subr.mxu0 0.0
    %659 = vmatpush2.msra.mxu0 0.0
    %660 = vmatprep.mubr.f32.mxu0 0.0
    %661 = vmatmul.mubr.f32.gmra.mxu0 %v591
    %v662 = vpop.f32.mrf.mxu0
    %v663 = vadd.f32 0.0, %v662
    %v664 = vpop.f32.mrf.mxu0
    %v665 = vadd.f32 0.0, %v664
    %666 = vdwg.mxu0
    %667 = vmatprep.subr.mxu0 %v413
    %668 = vmatpush1.msra.mxu0 %v412
    %669 = vmatprep.subr.mxu0 %v409
    %670 = vmatpush1.msra.mxu0 %v408
    %671 = vmatprep.subr.mxu0 %v405
    %672 = vmatpush1.msra.mxu0 %v404
    %673 = vmatprep.subr.mxu0 %v401
    %674 = vmatpush1.msra.mxu0 %v400
    %675 = vmatprep.subr.mxu0 %v397
    %676 = vmatpush1.msra.mxu0 %v396
    %677 = vmatprep.subr.mxu0 %v393
    %678 = vmatpush1.msra.mxu0 %v392
    %679 = vmatprep.subr.mxu0 %v389
    %680 = vmatpush1.msra.mxu0 %v388
    %681 = vmatprep.subr.mxu0 %v385
    %682 = vmatpush1.msra.mxu0 %v384
    %683 = vmatprep.subr.mxu0 %v381
    %684 = vmatpush1.msra.mxu0 %v380
    %685 = vmatprep.subr.mxu0 %v377
    %686 = vmatpush1.msra.mxu0 %v376
    %687 = vmatprep.subr.mxu0 %v373
    %688 = vmatpush1.msra.mxu0 %v372
    %689 = vmatprep.subr.mxu0 %v369
    %690 = vmatpush1.msra.mxu0 %v368
    %691 = vmatprep.subr.mxu0 %v365
    %692 = vmatpush1.msra.mxu0 %v364
    %693 = vmatprep.subr.mxu0 %v361
    %694 = vmatpush1.msra.mxu0 %v360
    %695 = vmatprep.subr.mxu0 %v357
    %696 = vmatpush1.msra.mxu0 %v356
    %697 = vmatprep.subr.mxu0 %v353
    %698 = vmatpush1.msra.mxu0 %v352
    %699 = vmatprep.subr.mxu0 0.0
    %700 = vmatpush2.msra.mxu0 0.0
    %701 = vmatprep.subr.mxu0 0.0
    %702 = vmatpush2.msra.mxu0 0.0
    %703 = vmatprep.subr.mxu0 0.0
    %704 = vmatpush2.msra.mxu0 0.0
    %705 = vmatprep.subr.mxu0 0.0
    %706 = vmatpush2.msra.mxu0 0.0
    %707 = vmatprep.subr.mxu0 0.0
    %708 = vmatpush2.msra.mxu0 0.0
    %709 = vmatprep.subr.mxu0 0.0
    %710 = vmatpush2.msra.mxu0 0.0
    %711 = vmatprep.subr.mxu0 0.0
    %712 = vmatpush2.msra.mxu0 0.0
    %713 = vmatprep.subr.mxu0 0.0
    %714 = vmatpush2.msra.mxu0 0.0
    %715 = vmatprep.subr.mxu0 0.0
    %716 = vmatpush2.msra.mxu0 0.0
    %717 = vmatprep.subr.mxu0 0.0
    %718 = vmatpush2.msra.mxu0 0.0
    %719 = vmatprep.subr.mxu0 0.0
    %720 = vmatpush2.msra.mxu0 0.0
    %721 = vmatprep.subr.mxu0 0.0
    %722 = vmatpush2.msra.mxu0 0.0
    %723 = vmatprep.subr.mxu0 0.0
    %724 = vmatpush2.msra.mxu0 0.0
    %725 = vmatprep.subr.mxu0 0.0
    %726 = vmatpush2.msra.mxu0 0.0
    %727 = vmatprep.subr.mxu0 0.0
    %728 = vmatpush2.msra.mxu0 0.0
    %729 = vmatprep.subr.mxu0 0.0
    %730 = vmatpush2.msra.mxu0 0.0
    %731 = vmatprep.mubr.f32.mxu0 0.0
    %732 = vmatmul.mubr.f32.gmra.mxu0 %v591
    %v733 = vpop.f32.mrf.mxu0
    %v734 = vadd.f32 0.0, %v733
    %v735 = vpop.f32.mrf.mxu0
    %v736 = vadd.f32 0.0, %v735
    %737 = vdwg.mxu0
    %v738 = vadd.f32 %v592, %v663
    %v739 = vadd.f32 %v593, %v665
    %v740 = vadd.f32 %v594, %v734
    %v741 = vadd.f32 %v595, %v736
    %v742 = vtanh.pop %v738
    %v743 = vtanh.pop %v739
    %v744 = vtanh.pop %v740
    %v745 = vtanh.pop %v741
    %v746 = vmul.f32 %v742, 0.5
    %v747 = vadd.f32 %v746, 0.5
    %v748 = vmul.f32 %v743, 0.5
    %v749 = vadd.f32 %v748, 0.5
    %v750 = vmul.f32 %v745, 0.5
    %v751 = vadd.f32 %v750, 0.5
    %v752 = vmul.f32 %v749, %v589
    %v753 = vmul.f32 %v747, %v744
    %v754 = vadd.f32 %v752, %v753
    %v755 = vtanh.pop %v754
    %v756 = vmul.f32 %v751, %v755
    %v757 = vld [vmem:[#allocation2 + $0x60] sm:$0xff]
    %v758 = vld [vmem:[#allocation2 + $0x68] sm:$0xff]
    %v759 = vld [vmem:[#allocation2 + $0x70] sm:$0xff]
    %v760 = vld [vmem:[#allocation2 + $0x78] sm:$0xff]
    %761 = vmatprep.subr.mxu0 %v411
    %762 = vmatpush1.msra.mxu0 %v410
    %763 = vmatprep.subr.mxu0 %v407
    %764 = vmatpush1.msra.mxu0 %v406
    %765 = vmatprep.subr.mxu0 %v403
    %766 = vmatpush1.msra.mxu0 %v402
    %767 = vmatprep.subr.mxu0 %v399
    %768 = vmatpush1.msra.mxu0 %v398
    %769 = vmatprep.subr.mxu0 %v395
    %770 = vmatpush1.msra.mxu0 %v394
    %771 = vmatprep.subr.mxu0 %v391
    %772 = vmatpush1.msra.mxu0 %v390
    %773 = vmatprep.subr.mxu0 %v387
    %774 = vmatpush1.msra.mxu0 %v386
    %775 = vmatprep.subr.mxu0 %v383
    %776 = vmatpush1.msra.mxu0 %v382
    %777 = vmatprep.subr.mxu0 %v379
    %778 = vmatpush1.msra.mxu0 %v378
    %779 = vmatprep.subr.mxu0 %v375
    %780 = vmatpush1.msra.mxu0 %v374
    %781 = vmatprep.subr.mxu0 %v371
    %782 = vmatpush1.msra.mxu0 %v370
    %783 = vmatprep.subr.mxu0 %v367
    %784 = vmatpush1.msra.mxu0 %v366
    %785 = vmatprep.subr.mxu0 %v363
    %786 = vmatpush1.msra.mxu0 %v362
    %787 = vmatprep.subr.mxu0 %v359
    %788 = vmatpush1.msra.mxu0 %v358
    %789 = vmatprep.subr.mxu0 %v355
    %790 = vmatpush1.msra.mxu0 %v354
    %791 = vmatprep.subr.mxu0 %v351
    %792 = vmatpush1.msra.mxu0 %v350
    %793 = vmatprep.subr.mxu0 0.0
    %794 = vmatpush2.msra.mxu0 0.0
    %795 = vmatprep.subr.mxu0 0.0
    %796 = vmatpush2.msra.mxu0 0.0
    %797 = vmatprep.subr.mxu0 0.0
    %798 = vmatpush2.msra.mxu0 0.0
    %799 = vmatprep.subr.mxu0 0.0
    %800 = vmatpush2.msra.mxu0 0.0
    %801 = vmatprep.subr.mxu0 0.0
    %802 = vmatpush2.msra.mxu0 0.0
    %803 = vmatprep.subr.mxu0 0.0
    %804 = vmatpush2.msra.mxu0 0.0
    %805 = vmatprep.subr.mxu0 0.0
    %806 = vmatpush2.msra.mxu0 0.0
    %807 = vmatprep.subr.mxu0 0.0
    %808 = vmatpush2.msra.mxu0 0.0
    %809 = vmatprep.subr.mxu0 0.0
    %810 = vmatpush2.msra.mxu0 0.0
    %811 = vmatprep.subr.mxu0 0.0
    %812 = vmatpush2.msra.mxu0 0.0
    %813 = vmatprep.subr.mxu0 0.0
    %814 = vmatpush2.msra.mxu0 0.0
    %815 = vmatprep.subr.mxu0 0.0
    %816 = vmatpush2.msra.mxu0 0.0
    %817 = vmatprep.subr.mxu0 0.0
    %818 = vmatpush2.msra.mxu0 0.0
    %819 = vmatprep.subr.mxu0 0.0
    %820 = vmatpush2.msra.mxu0 0.0
    %821 = vmatprep.subr.mxu0 0.0
    %822 = vmatpush2.msra.mxu0 0.0
    %823 = vmatprep.subr.mxu0 0.0
    %824 = vmatpush2.msra.mxu0 0.0
    %825 = vmatprep.mubr.f32.mxu0 0.0
    %826 = vmatmul.mubr.f32.gmra.mxu0 %v756
    %v827 = vpop.f32.mrf.mxu0
    %v828 = vadd.f32 0.0, %v827
    %v829 = vpop.f32.mrf.mxu0
    %v830 = vadd.f32 0.0, %v829
    %831 = vdwg.mxu0
    %832 = vmatprep.subr.mxu0 %v413
    %833 = vmatpush1.msra.mxu0 %v412
    %834 = vmatprep.subr.mxu0 %v409
    %835 = vmatpush1.msra.mxu0 %v408
    %836 = vmatprep.subr.mxu0 %v405
    %837 = vmatpush1.msra.mxu0 %v404
    %838 = vmatprep.subr.mxu0 %v401
    %839 = vmatpush1.msra.mxu0 %v400
    %840 = vmatprep.subr.mxu0 %v397
    %841 = vmatpush1.msra.mxu0 %v396
    %842 = vmatprep.subr.mxu0 %v393
    %843 = vmatpush1.msra.mxu0 %v392
    %844 = vmatprep.subr.mxu0 %v389
    %845 = vmatpush1.msra.mxu0 %v388
    %846 = vmatprep.subr.mxu0 %v385
    %847 = vmatpush1.msra.mxu0 %v384
    %848 = vmatprep.subr.mxu0 %v381
    %849 = vmatpush1.msra.mxu0 %v380
    %850 = vmatprep.subr.mxu0 %v377
    %851 = vmatpush1.msra.mxu0 %v376
    %852 = vmatprep.subr.mxu0 %v373
    %853 = vmatpush1.msra.mxu0 %v372
    %854 = vmatprep.subr.mxu0 %v369
    %855 = vmatpush1.msra.mxu0 %v368
    %856 = vmatprep.subr.mxu0 %v365
    %857 = vmatpush1.msra.mxu0 %v364
    %858 = vmatprep.subr.mxu0 %v361
    %859 = vmatpush1.msra.mxu0 %v360
    %860 = vmatprep.subr.mxu0 %v357
    %861 = vmatpush1.msra.mxu0 %v356
    %862 = vmatprep.subr.mxu0 %v353
    %863 = vmatpush1.msra.mxu0 %v352
    %864 = vmatprep.subr.mxu0 0.0
    %865 = vmatpush2.msra.mxu0 0.0
    %866 = vmatprep.subr.mxu0 0.0
    %867 = vmatpush2.msra.mxu0 0.0
    %868 = vmatprep.subr.mxu0 0.0
    %869 = vmatpush2.msra.mxu0 0.0
    %870 = vmatprep.subr.mxu0 0.0
    %871 = vmatpush2.msra.mxu0 0.0
    %872 = vmatprep.subr.mxu0 0.0
    %873 = vmatpush2.msra.mxu0 0.0
    %874 = vmatprep.subr.mxu0 0.0
    %875 = vmatpush2.msra.mxu0 0.0
    %876 = vmatprep.subr.mxu0 0.0
    %877 = vmatpush2.msra.mxu0 0.0
    %878 = vmatprep.subr.mxu0 0.0
    %879 = vmatpush2.msra.mxu0 0.0
    %880 = vmatprep.subr.mxu0 0.0
    %881 = vmatpush2.msra.mxu0 0.0
    %882 = vmatprep.subr.mxu0 0.0
    %883 = vmatpush2.msra.mxu0 0.0
    %884 = vmatprep.subr.mxu0 0.0
    %885 = vmatpush2.msra.mxu0 0.0
    %886 = vmatprep.subr.mxu0 0.0
    %887 = vmatpush2.msra.mxu0 0.0
    %888 = vmatprep.subr.mxu0 0.0
    %889 = vmatpush2.msra.mxu0 0.0
    %890 = vmatprep.subr.mxu0 0.0
    %891 = vmatpush2.msra.mxu0 0.0
    %892 = vmatprep.subr.mxu0 0.0
    %893 = vmatpush2.msra.mxu0 0.0
    %894 = vmatprep.subr.mxu0 0.0
    %895 = vmatpush2.msra.mxu0 0.0
    %896 = vmatprep.mubr.f32.mxu0 0.0
    %897 = vmatmul.mubr.f32.gmra.mxu0 %v756
    %v898 = vpop.f32.mrf.mxu0
    %v899 = vadd.f32 0.0, %v898
    %v900 = vpop.f32.mrf.mxu0
    %v901 = vadd.f32 0.0, %v900
    %902 = vdwg.mxu0
    %v903 = vadd.f32 %v757, %v828
    %v904 = vadd.f32 %v758, %v830
    %v905 = vadd.f32 %v759, %v899
    %v906 = vadd.f32 %v760, %v901
    %v907 = vtanh.pop %v903
    %v908 = vtanh.pop %v904
    %v909 = vtanh.pop %v905
    %v910 = vtanh.pop %v906
    %v911 = vmul.f32 %v907, 0.5
    %v912 = vadd.f32 %v911, 0.5
    %v913 = vmul.f32 %v908, 0.5
    %v914 = vadd.f32 %v913, 0.5
    %v915 = vmul.f32 %v910, 0.5
    %v916 = vadd.f32 %v915, 0.5
    %v917 = vmul.f32 %v914, %v754
    %v918 = vmul.f32 %v912, %v909
    %v919 = vadd.f32 %v917, %v918
    %v920 = vtanh.pop %v919
    %v921 = vmul.f32 %v916, %v920
    %v922 = vld [vmem:[#allocation2 + $0x80] sm:$0xff]
    %v923 = vld [vmem:[#allocation2 + $0x88] sm:$0xff]
    %v924 = vld [vmem:[#allocation2 + $0x90] sm:$0xff]
    %v925 = vld [vmem:[#allocation2 + $0x98] sm:$0xff]
    %926 = vmatprep.subr.mxu0 %v411
    %927 = vmatpush1.msra.mxu0 %v410
    %928 = vmatprep.subr.mxu0 %v407
    %929 = vmatpush1.msra.mxu0 %v406
    %930 = vmatprep.subr.mxu0 %v403
    %931 = vmatpush1.msra.mxu0 %v402
    %932 = vmatprep.subr.mxu0 %v399
    %933 = vmatpush1.msra.mxu0 %v398
    %934 = vmatprep.subr.mxu0 %v395
    %935 = vmatpush1.msra.mxu0 %v394
    %936 = vmatprep.subr.mxu0 %v391
    %937 = vmatpush1.msra.mxu0 %v390
    %938 = vmatprep.subr.mxu0 %v387
    %939 = vmatpush1.msra.mxu0 %v386
    %940 = vmatprep.subr.mxu0 %v383
    %941 = vmatpush1.msra.mxu0 %v382
    %942 = vmatprep.subr.mxu0 %v379
    %943 = vmatpush1.msra.mxu0 %v378
    %944 = vmatprep.subr.mxu0 %v375
    %945 = vmatpush1.msra.mxu0 %v374
    %946 = vmatprep.subr.mxu0 %v371
    %947 = vmatpush1.msra.mxu0 %v370
    %948 = vmatprep.subr.mxu0 %v367
    %949 = vmatpush1.msra.mxu0 %v366
    %950 = vmatprep.subr.mxu0 %v363
    %951 = vmatpush1.msra.mxu0 %v362
    %952 = vmatprep.subr.mxu0 %v359
    %953 = vmatpush1.msra.mxu0 %v358
    %954 = vmatprep.subr.mxu0 %v355
    %955 = vmatpush1.msra.mxu0 %v354
    %956 = vmatprep.subr.mxu0 %v351
    %957 = vmatpush1.msra.mxu0 %v350
    %958 = vmatprep.subr.mxu0 0.0
    %959 = vmatpush2.msra.mxu0 0.0
    %960 = vmatprep.subr.mxu0 0.0
    %961 = vmatpush2.msra.mxu0 0.0
    %962 = vmatprep.subr.mxu0 0.0
    %963 = vmatpush2.msra.mxu0 0.0
    %964 = vmatprep.subr.mxu0 0.0
    %965 = vmatpush2.msra.mxu0 0.0
    %966 = vmatprep.subr.mxu0 0.0
    %967 = vmatpush2.msra.mxu0 0.0
    %968 = vmatprep.subr.mxu0 0.0
    %969 = vmatpush2.msra.mxu0 0.0
    %970 = vmatprep.subr.mxu0 0.0
    %971 = vmatpush2.msra.mxu0 0.0
    %972 = vmatprep.subr.mxu0 0.0
    %973 = vmatpush2.msra.mxu0 0.0
    %974 = vmatprep.subr.mxu0 0.0
    %975 = vmatpush2.msra.mxu0 0.0
    %976 = vmatprep.subr.mxu0 0.0
    %977 = vmatpush2.msra.mxu0 0.0
    %978 = vmatprep.subr.mxu0 0.0
    %979 = vmatpush2.msra.mxu0 0.0
    %980 = vmatprep.subr.mxu0 0.0
    %981 = vmatpush2.msra.mxu0 0.0
    %982 = vmatprep.subr.mxu0 0.0
    %983 = vmatpush2.msra.mxu0 0.0
    %984 = vmatprep.subr.mxu0 0.0
    %985 = vmatpush2.msra.mxu0 0.0
    %986 = vmatprep.subr.mxu0 0.0
    %987 = vmatpush2.msra.mxu0 0.0
    %988 = vmatprep.subr.mxu0 0.0
    %989 = vmatpush2.msra.mxu0 0.0
    %990 = vmatprep.mubr.f32.mxu0 0.0
    %991 = vmatmul.mubr.f32.gmra.mxu0 %v921
    %v992 = vpop.f32.mrf.mxu0
    %v993 = vadd.f32 0.0, %v992
    %v994 = vpop.f32.mrf.mxu0
    %v995 = vadd.f32 0.0, %v994
    %996 = vdwg.mxu0
    %997 = vmatprep.subr.mxu0 %v413
    %998 = vmatpush1.msra.mxu0 %v412
    %999 = vmatprep.subr.mxu0 %v409
    %1000 = vmatpush1.msra.mxu0 %v408
    %1001 = vmatprep.subr.mxu0 %v405
    %1002 = vmatpush1.msra.mxu0 %v404
    %1003 = vmatprep.subr.mxu0 %v401
    %1004 = vmatpush1.msra.mxu0 %v400
    %1005 = vmatprep.subr.mxu0 %v397
    %1006 = vmatpush1.msra.mxu0 %v396
    %1007 = vmatprep.subr.mxu0 %v393
    %1008 = vmatpush1.msra.mxu0 %v392
    %1009 = vmatprep.subr.mxu0 %v389
    %1010 = vmatpush1.msra.mxu0 %v388
    %1011 = vmatprep.subr.mxu0 %v385
    %1012 = vmatpush1.msra.mxu0 %v384
    %1013 = vmatprep.subr.mxu0 %v381
    %1014 = vmatpush1.msra.mxu0 %v380
    %1015 = vmatprep.subr.mxu0 %v377
    %1016 = vmatpush1.msra.mxu0 %v376
    %1017 = vmatprep.subr.mxu0 %v373
    %1018 = vmatpush1.msra.mxu0 %v372
    %1019 = vmatprep.subr.mxu0 %v369
    %1020 = vmatpush1.msra.mxu0 %v368
    %1021 = vmatprep.subr.mxu0 %v365
    %1022 = vmatpush1.msra.mxu0 %v364
    %1023 = vmatprep.subr.mxu0 %v361
    %1024 = vmatpush1.msra.mxu0 %v360
    %1025 = vmatprep.subr.mxu0 %v357
    %1026 = vmatpush1.msra.mxu0 %v356
    %1027 = vmatprep.subr.mxu0 %v353
    %1028 = vmatpush1.msra.mxu0 %v352
    %1029 = vmatprep.subr.mxu0 0.0
    %1030 = vmatpush2.msra.mxu0 0.0
    %1031 = vmatprep.subr.mxu0 0.0
    %1032 = vmatpush2.msra.mxu0 0.0
    %1033 = vmatprep.subr.mxu0 0.0
    %1034 = vmatpush2.msra.mxu0 0.0
    %1035 = vmatprep.subr.mxu0 0.0
    %1036 = vmatpush2.msra.mxu0 0.0
    %1037 = vmatprep.subr.mxu0 0.0
    %1038 = vmatpush2.msra.mxu0 0.0
    %1039 = vmatprep.subr.mxu0 0.0
    %1040 = vmatpush2.msra.mxu0 0.0
    %1041 = vmatprep.subr.mxu0 0.0
    %1042 = vmatpush2.msra.mxu0 0.0
    %1043 = vmatprep.subr.mxu0 0.0
    %1044 = vmatpush2.msra.mxu0 0.0
    %1045 = vmatprep.subr.mxu0 0.0
    %1046 = vmatpush2.msra.mxu0 0.0
    %1047 = vmatprep.subr.mxu0 0.0
    %1048 = vmatpush2.msra.mxu0 0.0
    %1049 = vmatprep.subr.mxu0 0.0
    %1050 = vmatpush2.msra.mxu0 0.0
    %1051 = vmatprep.subr.mxu0 0.0
    %1052 = vmatpush2.msra.mxu0 0.0
    %1053 = vmatprep.subr.mxu0 0.0
    %1054 = vmatpush2.msra.mxu0 0.0
    %1055 = vmatprep.subr.mxu0 0.0
    %1056 = vmatpush2.msra.mxu0 0.0
    %1057 = vmatprep.subr.mxu0 0.0
    %1058 = vmatpush2.msra.mxu0 0.0
    %1059 = vmatprep.subr.mxu0 0.0
    %1060 = vmatpush2.msra.mxu0 0.0
    %1061 = vmatprep.mubr.f32.mxu0 0.0
    %1062 = vmatmul.mubr.f32.gmra.mxu0 %v921
    %v1063 = vpop.f32.mrf.mxu0
    %v1064 = vadd.f32 0.0, %v1063
    %v1065 = vpop.f32.mrf.mxu0
    %v1066 = vadd.f32 0.0, %v1065
    %1067 = vdwg.mxu0
    %v1068 = vadd.f32 %v922, %v993
    %v1069 = vadd.f32 %v923, %v995
    %v1070 = vadd.f32 %v924, %v1064
    %v1071 = vadd.f32 %v925, %v1066
    %v1072 = vtanh.pop %v1068
    %v1073 = vtanh.pop %v1069
    %v1074 = vtanh.pop %v1070
    %v1075 = vtanh.pop %v1071
    %v1076 = vmul.f32 %v1072, 0.5
    %v1077 = vadd.f32 %v1076, 0.5
    %v1078 = vmul.f32 %v1073, 0.5
    %v1079 = vadd.f32 %v1078, 0.5
    %v1080 = vmul.f32 %v1075, 0.5
    %v1081 = vadd.f32 %v1080, 0.5
    %v1082 = vmul.f32 %v1079, %v919
    %v1083 = vmul.f32 %v1077, %v1074
    %v1084 = vadd.f32 %v1082, %v1083
    %v1085 = vtanh.pop %v1084
    %v1086 = vmul.f32 %v1081, %v1085
    %v1087 = vld [vmem:[#allocation2 + $0xa0] sm:$0xff]
    %v1088 = vld [vmem:[#allocation2 + $0xa8] sm:$0xff]
    %v1089 = vld [vmem:[#allocation2 + $0xb0] sm:$0xff]
    %v1090 = vld [vmem:[#allocation2 + $0xb8] sm:$0xff]
    %1091 = vmatprep.subr.mxu0 %v411
    %1092 = vmatpush1.msra.mxu0 %v410
    %1093 = vmatprep.subr.mxu0 %v407
    %1094 = vmatpush1.msra.mxu0 %v406
    %1095 = vmatprep.subr.mxu0 %v403
    %1096 = vmatpush1.msra.mxu0 %v402
    %1097 = vmatprep.subr.mxu0 %v399
    %1098 = vmatpush1.msra.mxu0 %v398
    %1099 = vmatprep.subr.mxu0 %v395
    %1100 = vmatpush1.msra.mxu0 %v394
    %1101 = vmatprep.subr.mxu0 %v391
    %1102 = vmatpush1.msra.mxu0 %v390
    %1103 = vmatprep.subr.mxu0 %v387
    %1104 = vmatpush1.msra.mxu0 %v386
    %1105 = vmatprep.subr.mxu0 %v383
    %1106 = vmatpush1.msra.mxu0 %v382
    %1107 = vmatprep.subr.mxu0 %v379
    %1108 = vmatpush1.msra.mxu0 %v378
    %1109 = vmatprep.subr.mxu0 %v375
    %1110 = vmatpush1.msra.mxu0 %v374
    %1111 = vmatprep.subr.mxu0 %v371
    %1112 = vmatpush1.msra.mxu0 %v370
    %1113 = vmatprep.subr.mxu0 %v367
    %1114 = vmatpush1.msra.mxu0 %v366
    %1115 = vmatprep.subr.mxu0 %v363
    %1116 = vmatpush1.msra.mxu0 %v362
    %1117 = vmatprep.subr.mxu0 %v359
    %1118 = vmatpush1.msra.mxu0 %v358
    %1119 = vmatprep.subr.mxu0 %v355
    %1120 = vmatpush1.msra.mxu0 %v354
    %1121 = vmatprep.subr.mxu0 %v351
    %1122 = vmatpush1.msra.mxu0 %v350
    %1123 = vmatprep.subr.mxu0 0.0
    %1124 = vmatpush2.msra.mxu0 0.0
    %1125 = vmatprep.subr.mxu0 0.0
    %1126 = vmatpush2.msra.mxu0 0.0
    %1127 = vmatprep.subr.mxu0 0.0
    %1128 = vmatpush2.msra.mxu0 0.0
    %1129 = vmatprep.subr.mxu0 0.0
    %1130 = vmatpush2.msra.mxu0 0.0
    %1131 = vmatprep.subr.mxu0 0.0
    %1132 = vmatpush2.msra.mxu0 0.0
    %1133 = vmatprep.subr.mxu0 0.0
    %1134 = vmatpush2.msra.mxu0 0.0
    %1135 = vmatprep.subr.mxu0 0.0
    %1136 = vmatpush2.msra.mxu0 0.0
    %1137 = vmatprep.subr.mxu0 0.0
    %1138 = vmatpush2.msra.mxu0 0.0
    %1139 = vmatprep.subr.mxu0 0.0
    %1140 = vmatpush2.msra.mxu0 0.0
    %1141 = vmatprep.subr.mxu0 0.0
    %1142 = vmatpush2.msra.mxu0 0.0
    %1143 = vmatprep.subr.mxu0 0.0
    %1144 = vmatpush2.msra.mxu0 0.0
    %1145 = vmatprep.subr.mxu0 0.0
    %1146 = vmatpush2.msra.mxu0 0.0
    %1147 = vmatprep.subr.mxu0 0.0
    %1148 = vmatpush2.msra.mxu0 0.0
    %1149 = vmatprep.subr.mxu0 0.0
    %1150 = vmatpush2.msra.mxu0 0.0
    %1151 = vmatprep.subr.mxu0 0.0
    %1152 = vmatpush2.msra.mxu0 0.0
    %1153 = vmatprep.subr.mxu0 0.0
    %1154 = vmatpush2.msra.mxu0 0.0
    %1155 = vmatprep.mubr.f32.mxu0 0.0
    %1156 = vmatmul.mubr.f32.gmra.mxu0 %v1086
    %v1157 = vpop.f32.mrf.mxu0
    %v1158 = vadd.f32 0.0, %v1157
    %v1159 = vpop.f32.mrf.mxu0
    %v1160 = vadd.f32 0.0, %v1159
    %1161 = vdwg.mxu0
    %1162 = vmatprep.subr.mxu0 %v413
    %1163 = vmatpush1.msra.mxu0 %v412
    %1164 = vmatprep.subr.mxu0 %v409
    %1165 = vmatpush1.msra.mxu0 %v408
    %1166 = vmatprep.subr.mxu0 %v405
    %1167 = vmatpush1.msra.mxu0 %v404
    %1168 = vmatprep.subr.mxu0 %v401
    %1169 = vmatpush1.msra.mxu0 %v400
    %1170 = vmatprep.subr.mxu0 %v397
    %1171 = vmatpush1.msra.mxu0 %v396
    %1172 = vmatprep.subr.mxu0 %v393
    %1173 = vmatpush1.msra.mxu0 %v392
    %1174 = vmatprep.subr.mxu0 %v389
    %1175 = vmatpush1.msra.mxu0 %v388
    %1176 = vmatprep.subr.mxu0 %v385
    %1177 = vmatpush1.msra.mxu0 %v384
    %1178 = vmatprep.subr.mxu0 %v381
    %1179 = vmatpush1.msra.mxu0 %v380
    %1180 = vmatprep.subr.mxu0 %v377
    %1181 = vmatpush1.msra.mxu0 %v376
    %1182 = vmatprep.subr.mxu0 %v373
    %1183 = vmatpush1.msra.mxu0 %v372
    %1184 = vmatprep.subr.mxu0 %v369
    %1185 = vmatpush1.msra.mxu0 %v368
    %1186 = vmatprep.subr.mxu0 %v365
    %1187 = vmatpush1.msra.mxu0 %v364
    %1188 = vmatprep.subr.mxu0 %v361
    %1189 = vmatpush1.msra.mxu0 %v360
    %1190 = vmatprep.subr.mxu0 %v357
    %1191 = vmatpush1.msra.mxu0 %v356
    %1192 = vmatprep.subr.mxu0 %v353
    %1193 = vmatpush1.msra.mxu0 %v352
    %1194 = vmatprep.subr.mxu0 0.0
    %1195 = vmatpush2.msra.mxu0 0.0
    %1196 = vmatprep.subr.mxu0 0.0
    %1197 = vmatpush2.msra.mxu0 0.0
    %1198 = vmatprep.subr.mxu0 0.0
    %1199 = vmatpush2.msra.mxu0 0.0
    %1200 = vmatprep.subr.mxu0 0.0
    %1201 = vmatpush2.msra.mxu0 0.0
    %1202 = vmatprep.subr.mxu0 0.0
    %1203 = vmatpush2.msra.mxu0 0.0
    %1204 = vmatprep.subr.mxu0 0.0
    %1205 = vmatpush2.msra.mxu0 0.0
    %1206 = vmatprep.subr.mxu0 0.0
    %1207 = vmatpush2.msra.mxu0 0.0
    %1208 = vmatprep.subr.mxu0 0.0
    %1209 = vmatpush2.msra.mxu0 0.0
    %1210 = vmatprep.subr.mxu0 0.0
    %1211 = vmatpush2.msra.mxu0 0.0
    %1212 = vmatprep.subr.mxu0 0.0
    %1213 = vmatpush2.msra.mxu0 0.0
    %1214 = vmatprep.subr.mxu0 0.0
    %1215 = vmatpush2.msra.mxu0 0.0
    %1216 = vmatprep.subr.mxu0 0.0
    %1217 = vmatpush2.msra.mxu0 0.0
    %1218 = vmatprep.subr.mxu0 0.0
    %1219 = vmatpush2.msra.mxu0 0.0
    %1220 = vmatprep.subr.mxu0 0.0
    %1221 = vmatpush2.msra.mxu0 0.0
    %1222 = vmatprep.subr.mxu0 0.0
    %1223 = vmatpush2.msra.mxu0 0.0
    %1224 = vmatprep.subr.mxu0 0.0
    %1225 = vmatpush2.msra.mxu0 0.0
    %1226 = vmatprep.mubr.f32.mxu0 0.0
    %1227 = vmatmul.mubr.f32.gmra.mxu0 %v1086
    %v1228 = vpop.f32.mrf.mxu0
    %v1229 = vadd.f32 0.0, %v1228
    %v1230 = vpop.f32.mrf.mxu0
    %v1231 = vadd.f32 0.0, %v1230
    %1232 = vdwg.mxu0
    %v1233 = vadd.f32 %v1087, %v1158
    %v1234 = vadd.f32 %v1088, %v1160
    %v1235 = vadd.f32 %v1089, %v1229
    %v1236 = vadd.f32 %v1090, %v1231
    %v1237 = vtanh.pop %v1233
    %v1238 = vtanh.pop %v1234
    %v1239 = vtanh.pop %v1235
    %v1240 = vtanh.pop %v1236
    %v1241 = vmul.f32 %v1237, 0.5
    %v1242 = vadd.f32 %v1241, 0.5
    %v1243 = vmul.f32 %v1238, 0.5
    %v1244 = vadd.f32 %v1243, 0.5
    %v1245 = vmul.f32 %v1240, 0.5
    %v1246 = vadd.f32 %v1245, 0.5
    %v1247 = vmul.f32 %v1244, %v1084
    %v1248 = vmul.f32 %v1242, %v1239
    %v1249 = vadd.f32 %v1247, %v1248
    %v1250 = vtanh.pop %v1249
    %v1251 = vmul.f32 %v1246, %v1250
    %v1252 = vld [vmem:[#allocation2 + $0xc0] sm:$0xff]
    %v1253 = vld [vmem:[#allocation2 + $0xc8] sm:$0xff]
    %v1254 = vld [vmem:[#allocation2 + $0xd0] sm:$0xff]
    %v1255 = vld [vmem:[#allocation2 + $0xd8] sm:$0xff]
    %1256 = vmatprep.subr.mxu0 %v411
    %1257 = vmatpush1.msra.mxu0 %v410
    %1258 = vmatprep.subr.mxu0 %v407
    %1259 = vmatpush1.msra.mxu0 %v406
    %1260 = vmatprep.subr.mxu0 %v403
    %1261 = vmatpush1.msra.mxu0 %v402
    %1262 = vmatprep.subr.mxu0 %v399
    %1263 = vmatpush1.msra.mxu0 %v398
    %1264 = vmatprep.subr.mxu0 %v395
    %1265 = vmatpush1.msra.mxu0 %v394
    %1266 = vmatprep.subr.mxu0 %v391
    %1267 = vmatpush1.msra.mxu0 %v390
    %1268 = vmatprep.subr.mxu0 %v387
    %1269 = vmatpush1.msra.mxu0 %v386
    %1270 = vmatprep.subr.mxu0 %v383
    %1271 = vmatpush1.msra.mxu0 %v382
    %1272 = vmatprep.subr.mxu0 %v379
    %1273 = vmatpush1.msra.mxu0 %v378
    %1274 = vmatprep.subr.mxu0 %v375
    %1275 = vmatpush1.msra.mxu0 %v374
    %1276 = vmatprep.subr.mxu0 %v371
    %1277 = vmatpush1.msra.mxu0 %v370
    %1278 = vmatprep.subr.mxu0 %v367
    %1279 = vmatpush1.msra.mxu0 %v366
    %1280 = vmatprep.subr.mxu0 %v363
    %1281 = vmatpush1.msra.mxu0 %v362
    %1282 = vmatprep.subr.mxu0 %v359
    %1283 = vmatpush1.msra.mxu0 %v358
    %1284 = vmatprep.subr.mxu0 %v355
    %1285 = vmatpush1.msra.mxu0 %v354
    %1286 = vmatprep.subr.mxu0 %v351
    %1287 = vmatpush1.msra.mxu0 %v350
    %1288 = vmatprep.subr.mxu0 0.0
    %1289 = vmatpush2.msra.mxu0 0.0
    %1290 = vmatprep.subr.mxu0 0.0
    %1291 = vmatpush2.msra.mxu0 0.0
    %1292 = vmatprep.subr.mxu0 0.0
    %1293 = vmatpush2.msra.mxu0 0.0
    %1294 = vmatprep.subr.mxu0 0.0
    %1295 = vmatpush2.msra.mxu0 0.0
    %1296 = vmatprep.subr.mxu0 0.0
    %1297 = vmatpush2.msra.mxu0 0.0
    %1298 = vmatprep.subr.mxu0 0.0
    %1299 = vmatpush2.msra.mxu0 0.0
    %1300 = vmatprep.subr.mxu0 0.0
    %1301 = vmatpush2.msra.mxu0 0.0
    %1302 = vmatprep.subr.mxu0 0.0
    %1303 = vmatpush2.msra.mxu0 0.0
    %1304 = vmatprep.subr.mxu0 0.0
    %1305 = vmatpush2.msra.mxu0 0.0
    %1306 = vmatprep.subr.mxu0 0.0
    %1307 = vmatpush2.msra.mxu0 0.0
    %1308 = vmatprep.subr.mxu0 0.0
    %1309 = vmatpush2.msra.mxu0 0.0
    %1310 = vmatprep.subr.mxu0 0.0
    %1311 = vmatpush2.msra.mxu0 0.0
    %1312 = vmatprep.subr.mxu0 0.0
    %1313 = vmatpush2.msra.mxu0 0.0
    %1314 = vmatprep.subr.mxu0 0.0
    %1315 = vmatpush2.msra.mxu0 0.0
    %1316 = vmatprep.subr.mxu0 0.0
    %1317 = vmatpush2.msra.mxu0 0.0
    %1318 = vmatprep.subr.mxu0 0.0
    %1319 = vmatpush2.msra.mxu0 0.0
    %1320 = vmatprep.mubr.f32.mxu0 0.0
    %1321 = vmatmul.mubr.f32.gmra.mxu0 %v1251
    %v1322 = vpop.f32.mrf.mxu0
    %v1323 = vadd.f32 0.0, %v1322
    %v1324 = vpop.f32.mrf.mxu0
    %v1325 = vadd.f32 0.0, %v1324
    %1326 = vdwg.mxu0
    %1327 = vmatprep.subr.mxu0 %v413
    %1328 = vmatpush1.msra.mxu0 %v412
    %1329 = vmatprep.subr.mxu0 %v409
    %1330 = vmatpush1.msra.mxu0 %v408
    %1331 = vmatprep.subr.mxu0 %v405
    %1332 = vmatpush1.msra.mxu0 %v404
    %1333 = vmatprep.subr.mxu0 %v401
    %1334 = vmatpush1.msra.mxu0 %v400
    %1335 = vmatprep.subr.mxu0 %v397
    %1336 = vmatpush1.msra.mxu0 %v396
    %1337 = vmatprep.subr.mxu0 %v393
    %1338 = vmatpush1.msra.mxu0 %v392
    %1339 = vmatprep.subr.mxu0 %v389
    %1340 = vmatpush1.msra.mxu0 %v388
    %1341 = vmatprep.subr.mxu0 %v385
    %1342 = vmatpush1.msra.mxu0 %v384
    %1343 = vmatprep.subr.mxu0 %v381
    %1344 = vmatpush1.msra.mxu0 %v380
    %1345 = vmatprep.subr.mxu0 %v377
    %1346 = vmatpush1.msra.mxu0 %v376
    %1347 = vmatprep.subr.mxu0 %v373
    %1348 = vmatpush1.msra.mxu0 %v372
    %1349 = vmatprep.subr.mxu0 %v369
    %1350 = vmatpush1.msra.mxu0 %v368
    %1351 = vmatprep.subr.mxu0 %v365
    %1352 = vmatpush1.msra.mxu0 %v364
    %1353 = vmatprep.subr.mxu0 %v361
    %1354 = vmatpush1.msra.mxu0 %v360
    %1355 = vmatprep.subr.mxu0 %v357
    %1356 = vmatpush1.msra.mxu0 %v356
    %1357 = vmatprep.subr.mxu0 %v353
    %1358 = vmatpush1.msra.mxu0 %v352
    %1359 = vmatprep.subr.mxu0 0.0
    %1360 = vmatpush2.msra.mxu0 0.0
    %1361 = vmatprep.subr.mxu0 0.0
    %1362 = vmatpush2.msra.mxu0 0.0
    %1363 = vmatprep.subr.mxu0 0.0
    %1364 = vmatpush2.msra.mxu0 0.0
    %1365 = vmatprep.subr.mxu0 0.0
    %1366 = vmatpush2.msra.mxu0 0.0
    %1367 = vmatprep.subr.mxu0 0.0
    %1368 = vmatpush2.msra.mxu0 0.0
    %1369 = vmatprep.subr.mxu0 0.0
    %1370 = vmatpush2.msra.mxu0 0.0
    %1371 = vmatprep.subr.mxu0 0.0
    %1372 = vmatpush2.msra.mxu0 0.0
    %1373 = vmatprep.subr.mxu0 0.0
    %1374 = vmatpush2.msra.mxu0 0.0
    %1375 = vmatprep.subr.mxu0 0.0
    %1376 = vmatpush2.msra.mxu0 0.0
    %1377 = vmatprep.subr.mxu0 0.0
    %1378 = vmatpush2.msra.mxu0 0.0
    %1379 = vmatprep.subr.mxu0 0.0
    %1380 = vmatpush2.msra.mxu0 0.0
    %1381 = vmatprep.subr.mxu0 0.0
    %1382 = vmatpush2.msra.mxu0 0.0
    %1383 = vmatprep.subr.mxu0 0.0
    %1384 = vmatpush2.msra.mxu0 0.0
    %1385 = vmatprep.subr.mxu0 0.0
    %1386 = vmatpush2.msra.mxu0 0.0
    %1387 = vmatprep.subr.mxu0 0.0
    %1388 = vmatpush2.msra.mxu0 0.0
    %1389 = vmatprep.subr.mxu0 0.0
    %1390 = vmatpush2.msra.mxu0 0.0
    %1391 = vmatprep.mubr.f32.mxu0 0.0
    %1392 = vmatmul.mubr.f32.gmra.mxu0 %v1251
    %v1393 = vpop.f32.mrf.mxu0
    %v1394 = vadd.f32 0.0, %v1393
    %v1395 = vpop.f32.mrf.mxu0
    %v1396 = vadd.f32 0.0, %v1395
    %1397 = vdwg.mxu0
    %v1398 = vadd.f32 %v1252, %v1323
    %v1399 = vadd.f32 %v1253, %v1325
    %v1400 = vadd.f32 %v1254, %v1394
    %v1401 = vadd.f32 %v1255, %v1396
    %v1402 = vtanh.pop %v1398
    %v1403 = vtanh.pop %v1399
    %v1404 = vtanh.pop %v1400
    %v1405 = vtanh.pop %v1401
    %v1406 = vmul.f32 %v1402, 0.5
    %v1407 = vadd.f32 %v1406, 0.5
    %v1408 = vmul.f32 %v1403, 0.5
    %v1409 = vadd.f32 %v1408, 0.5
    %v1410 = vmul.f32 %v1405, 0.5
    %v1411 = vadd.f32 %v1410, 0.5
    %v1412 = vmul.f32 %v1409, %v1249
    %v1413 = vmul.f32 %v1407, %v1404
    %v1414 = vadd.f32 %v1412, %v1413
    %v1415 = vtanh.pop %v1414
    %v1416 = vmul.f32 %v1411, %v1415
    %v1417 = vld [vmem:[#allocation2 + $0xe0] sm:$0xff]
    %v1418 = vld [vmem:[#allocation2 + $0xe8] sm:$0xff]
    %v1419 = vld [vmem:[#allocation2 + $0xf0] sm:$0xff]
    %v1420 = vld [vmem:[#allocation2 + $0xf8] sm:$0xff]
    %1421 = vmatprep.subr.mxu0 %v411
    %1422 = vmatpush1.msra.mxu0 %v410
    %1423 = vmatprep.subr.mxu0 %v407
    %1424 = vmatpush1.msra.mxu0 %v406
    %1425 = vmatprep.subr.mxu0 %v403
    %1426 = vmatpush1.msra.mxu0 %v402
    %1427 = vmatprep.subr.mxu0 %v399
    %1428 = vmatpush1.msra.mxu0 %v398
    %1429 = vmatprep.subr.mxu0 %v395
    %1430 = vmatpush1.msra.mxu0 %v394
    %1431 = vmatprep.subr.mxu0 %v391
    %1432 = vmatpush1.msra.mxu0 %v390
    %1433 = vmatprep.subr.mxu0 %v387
    %1434 = vmatpush1.msra.mxu0 %v386
    %1435 = vmatprep.subr.mxu0 %v383
    %1436 = vmatpush1.msra.mxu0 %v382
    %1437 = vmatprep.subr.mxu0 %v379
    %1438 = vmatpush1.msra.mxu0 %v378
    %1439 = vmatprep.subr.mxu0 %v375
    %1440 = vmatpush1.msra.mxu0 %v374
    %1441 = vmatprep.subr.mxu0 %v371
    %1442 = vmatpush1.msra.mxu0 %v370
    %1443 = vmatprep.subr.mxu0 %v367
    %1444 = vmatpush1.msra.mxu0 %v366
    %1445 = vmatprep.subr.mxu0 %v363
    %1446 = vmatpush1.msra.mxu0 %v362
    %1447 = vmatprep.subr.mxu0 %v359
    %1448 = vmatpush1.msra.mxu0 %v358
    %1449 = vmatprep.subr.mxu0 %v355
    %1450 = vmatpush1.msra.mxu0 %v354
    %1451 = vmatprep.subr.mxu0 %v351
    %1452 = vmatpush1.msra.mxu0 %v350
    %1453 = vmatprep.subr.mxu0 0.0
    %1454 = vmatpush2.msra.mxu0 0.0
    %1455 = vmatprep.subr.mxu0 0.0
    %1456 = vmatpush2.msra.mxu0 0.0
    %1457 = vmatprep.subr.mxu0 0.0
    %1458 = vmatpush2.msra.mxu0 0.0
    %1459 = vmatprep.subr.mxu0 0.0
    %1460 = vmatpush2.msra.mxu0 0.0
    %1461 = vmatprep.subr.mxu0 0.0
    %1462 = vmatpush2.msra.mxu0 0.0
    %1463 = vmatprep.subr.mxu0 0.0
    %1464 = vmatpush2.msra.mxu0 0.0
    %1465 = vmatprep.subr.mxu0 0.0
    %1466 = vmatpush2.msra.mxu0 0.0
    %1467 = vmatprep.subr.mxu0 0.0
    %1468 = vmatpush2.msra.mxu0 0.0
    %1469 = vmatprep.subr.mxu0 0.0
    %1470 = vmatpush2.msra.mxu0 0.0
    %1471 = vmatprep.subr.mxu0 0.0
    %1472 = vmatpush2.msra.mxu0 0.0
    %1473 = vmatprep.subr.mxu0 0.0
    %1474 = vmatpush2.msra.mxu0 0.0
    %1475 = vmatprep.subr.mxu0 0.0
    %1476 = vmatpush2.msra.mxu0 0.0
    %1477 = vmatprep.subr.mxu0 0.0
    %1478 = vmatpush2.msra.mxu0 0.0
    %1479 = vmatprep.subr.mxu0 0.0
    %1480 = vmatpush2.msra.mxu0 0.0
    %1481 = vmatprep.subr.mxu0 0.0
    %1482 = vmatpush2.msra.mxu0 0.0
    %1483 = vmatprep.subr.mxu0 0.0
    %1484 = vmatpush2.msra.mxu0 0.0
    %1485 = vmatprep.mubr.f32.mxu0 0.0
    %1486 = vmatmul.mubr.f32.gmra.mxu0 %v1416
    %v1487 = vpop.f32.mrf.mxu0
    %v1488 = vadd.f32 0.0, %v1487
    %v1489 = vpop.f32.mrf.mxu0
    %v1490 = vadd.f32 0.0, %v1489
    %1491 = vdwg.mxu0
    %1492 = vmatprep.subr.mxu0 %v413
    %1493 = vmatpush1.msra.mxu0 %v412
    %1494 = vmatprep.subr.mxu0 %v409
    %1495 = vmatpush1.msra.mxu0 %v408
    %1496 = vmatprep.subr.mxu0 %v405
    %1497 = vmatpush1.msra.mxu0 %v404
    %1498 = vmatprep.subr.mxu0 %v401
    %1499 = vmatpush1.msra.mxu0 %v400
    %1500 = vmatprep.subr.mxu0 %v397
    %1501 = vmatpush1.msra.mxu0 %v396
    %1502 = vmatprep.subr.mxu0 %v393
    %1503 = vmatpush1.msra.mxu0 %v392
    %1504 = vmatprep.subr.mxu0 %v389
    %1505 = vmatpush1.msra.mxu0 %v388
    %1506 = vmatprep.subr.mxu0 %v385
    %1507 = vmatpush1.msra.mxu0 %v384
    %1508 = vmatprep.subr.mxu0 %v381
    %1509 = vmatpush1.msra.mxu0 %v380
    %1510 = vmatprep.subr.mxu0 %v377
    %1511 = vmatpush1.msra.mxu0 %v376
    %1512 = vmatprep.subr.mxu0 %v373
    %1513 = vmatpush1.msra.mxu0 %v372
    %1514 = vmatprep.subr.mxu0 %v369
    %1515 = vmatpush1.msra.mxu0 %v368
    %1516 = vmatprep.subr.mxu0 %v365
    %1517 = vmatpush1.msra.mxu0 %v364
    %1518 = vmatprep.subr.mxu0 %v361
    %1519 = vmatpush1.msra.mxu0 %v360
    %1520 = vmatprep.subr.mxu0 %v357
    %1521 = vmatpush1.msra.mxu0 %v356
    %1522 = vmatprep.subr.mxu0 %v353
    %1523 = vmatpush1.msra.mxu0 %v352
    %1524 = vmatprep.subr.mxu0 0.0
    %1525 = vmatpush2.msra.mxu0 0.0
    %1526 = vmatprep.subr.mxu0 0.0
    %1527 = vmatpush2.msra.mxu0 0.0
    %1528 = vmatprep.subr.mxu0 0.0
    %1529 = vmatpush2.msra.mxu0 0.0
    %1530 = vmatprep.subr.mxu0 0.0
    %1531 = vmatpush2.msra.mxu0 0.0
    %1532 = vmatprep.subr.mxu0 0.0
    %1533 = vmatpush2.msra.mxu0 0.0
    %1534 = vmatprep.subr.mxu0 0.0
    %1535 = vmatpush2.msra.mxu0 0.0
    %1536 = vmatprep.subr.mxu0 0.0
    %1537 = vmatpush2.msra.mxu0 0.0
    %1538 = vmatprep.subr.mxu0 0.0
    %1539 = vmatpush2.msra.mxu0 0.0
    %1540 = vmatprep.subr.mxu0 0.0
    %1541 = vmatpush2.msra.mxu0 0.0
    %1542 = vmatprep.subr.mxu0 0.0
    %1543 = vmatpush2.msra.mxu0 0.0
    %1544 = vmatprep.subr.mxu0 0.0
    %1545 = vmatpush2.msra.mxu0 0.0
    %1546 = vmatprep.subr.mxu0 0.0
    %1547 = vmatpush2.msra.mxu0 0.0
    %1548 = vmatprep.subr.mxu0 0.0
    %1549 = vmatpush2.msra.mxu0 0.0
    %1550 = vmatprep.subr.mxu0 0.0
    %1551 = vmatpush2.msra.mxu0 0.0
    %1552 = vmatprep.subr.mxu0 0.0
    %1553 = vmatpush2.msra.mxu0 0.0
    %1554 = vmatprep.subr.mxu0 0.0
    %1555 = vmatpush2.msra.mxu0 0.0
    %1556 = vmatprep.mubr.f32.mxu0 0.0
    %1557 = vmatmul.mubr.f32.gmra.mxu0 %v1416
    %v1558 = vpop.f32.mrf.mxu0
    %v1559 = vadd.f32 0.0, %v1558
    %v1560 = vpop.f32.mrf.mxu0
    %v1561 = vadd.f32 0.0, %v1560
    %1562 = vdwg.mxu0
    %v1563 = vadd.f32 %v1417, %v1488
    %v1564 = vadd.f32 %v1418, %v1490
    %v1565 = vadd.f32 %v1419, %v1559
    %v1566 = vadd.f32 %v1420, %v1561
    %v1567 = vtanh.pop %v1563
    %v1568 = vtanh.pop %v1564
    %v1569 = vtanh.pop %v1565
    %v1570 = vtanh.pop %v1566
    %v1571 = vmul.f32 %v1567, 0.5
    %v1572 = vadd.f32 %v1571, 0.5
    %v1573 = vmul.f32 %v1568, 0.5
    %v1574 = vadd.f32 %v1573, 0.5
    %v1575 = vmul.f32 %v1570, 0.5
    %v1576 = vadd.f32 %v1575, 0.5
    %v1577 = vmul.f32 %v1574, %v1414
    %v1578 = vmul.f32 %v1572, %v1569
    %v1579 = vadd.f32 %v1577, %v1578
    %v1580 = vtanh.pop %v1579
    %v1581 = vmul.f32 %v1576, %v1580
    %v1582 = vld [vmem:[#allocation6] sm:$0xff]
    %v1583 = vld [vmem:[#allocation6 + $0x8] sm:$0xff]
    %v1584 = vld [vmem:[#allocation6 + $0x10] sm:$0xff]
    %v1585 = vld [vmem:[#allocation6 + $0x18] sm:$0xff]
    %v1586 = vld [vmem:[#allocation6 + $0x20] sm:$0xff]
    %v1587 = vld [vmem:[#allocation6 + $0x28] sm:$0xff]
    %v1588 = vld [vmem:[#allocation6 + $0x30] sm:$0xff]
    %v1589 = vld [vmem:[#allocation6 + $0x38] sm:$0xff]
    %v1590 = vld [vmem:[#allocation6 + $0x40] sm:$0xff]
    %v1591 = vld [vmem:[#allocation6 + $0x48] sm:$0xff]
    %v1592 = vld [vmem:[#allocation6 + $0x50] sm:$0xff]
    %v1593 = vld [vmem:[#allocation6 + $0x58] sm:$0xff]
    %v1594 = vld [vmem:[#allocation6 + $0x60] sm:$0xff]
    %v1595 = vld [vmem:[#allocation6 + $0x68] sm:$0xff]
    %v1596 = vld [vmem:[#allocation6 + $0x70] sm:$0xff]
    %v1597 = vld [vmem:[#allocation6 + $0x78] sm:$0xff]
    %v1598 = vld [vmem:[#allocation6 + $0x80] sm:$0x1]
    %v1599 = vlaneseq
    %v1600 = vshrl.u32 %v1599, 7
    %v1601 = vsub.s32 0, %v1600
    %v1602 = vrot.slane %v1598, %v1601
    %1603 = vmatprep.subr.mxu0 0.0
    %1604 = vmatpush1.msra.mxu0 %v1597
    %1605 = vmatprep.subr.mxu0 0.0
    %1606 = vmatpush1.msra.mxu0 %v1596
    %1607 = vmatprep.subr.mxu0 0.0
    %1608 = vmatpush1.msra.mxu0 %v1595
    %1609 = vmatprep.subr.mxu0 0.0
    %1610 = vmatpush1.msra.mxu0 %v1594
    %1611 = vmatprep.subr.mxu0 0.0
    %1612 = vmatpush1.msra.mxu0 %v1593
    %1613 = vmatprep.subr.mxu0 0.0
    %1614 = vmatpush1.msra.mxu0 %v1592
    %1615 = vmatprep.subr.mxu0 0.0
    %1616 = vmatpush1.msra.mxu0 %v1591
    %1617 = vmatprep.subr.mxu0 0.0
    %1618 = vmatpush1.msra.mxu0 %v1590
    %1619 = vmatprep.subr.mxu0 0.0
    %1620 = vmatpush1.msra.mxu0 %v1589
    %1621 = vmatprep.subr.mxu0 0.0
    %1622 = vmatpush1.msra.mxu0 %v1588
    %1623 = vmatprep.subr.mxu0 0.0
    %1624 = vmatpush1.msra.mxu0 %v1587
    %1625 = vmatprep.subr.mxu0 0.0
    %1626 = vmatpush1.msra.mxu0 %v1586
    %1627 = vmatprep.subr.mxu0 0.0
    %1628 = vmatpush1.msra.mxu0 %v1585
    %1629 = vmatprep.subr.mxu0 0.0
    %1630 = vmatpush1.msra.mxu0 %v1584
    %1631 = vmatprep.subr.mxu0 0.0
    %1632 = vmatpush1.msra.mxu0 %v1583
    %1633 = vmatprep.subr.mxu0 0.0
    %1634 = vmatpush1.msra.mxu0 %v1582
    %1635 = vmatprep.subr.mxu0 0.0
    %1636 = vmatpush2.msra.mxu0 0.0
    %1637 = vmatprep.subr.mxu0 0.0
    %1638 = vmatpush2.msra.mxu0 0.0
    %1639 = vmatprep.subr.mxu0 0.0
    %1640 = vmatpush2.msra.mxu0 0.0
    %1641 = vmatprep.subr.mxu0 0.0
    %1642 = vmatpush2.msra.mxu0 0.0
    %1643 = vmatprep.subr.mxu0 0.0
    %1644 = vmatpush2.msra.mxu0 0.0
    %1645 = vmatprep.subr.mxu0 0.0
    %1646 = vmatpush2.msra.mxu0 0.0
    %1647 = vmatprep.subr.mxu0 0.0
    %1648 = vmatpush2.msra.mxu0 0.0
    %1649 = vmatprep.subr.mxu0 0.0
    %1650 = vmatpush2.msra.mxu0 0.0
    %1651 = vmatprep.subr.mxu0 0.0
    %1652 = vmatpush2.msra.mxu0 0.0
    %1653 = vmatprep.subr.mxu0 0.0
    %1654 = vmatpush2.msra.mxu0 0.0
    %1655 = vmatprep.subr.mxu0 0.0
    %1656 = vmatpush2.msra.mxu0 0.0
    %1657 = vmatprep.subr.mxu0 0.0
    %1658 = vmatpush2.msra.mxu0 0.0
    %1659 = vmatprep.subr.mxu0 0.0
    %1660 = vmatpush2.msra.mxu0 0.0
    %1661 = vmatprep.subr.mxu0 0.0
    %1662 = vmatpush2.msra.mxu0 0.0
    %1663 = vmatprep.subr.mxu0 0.0
    %1664 = vmatpush2.msra.mxu0 0.0
    %1665 = vmatprep.subr.mxu0 0.0
    %1666 = vmatpush2.msra.mxu0 0.0
    %1667 = vmatprep.mubr.f32.mxu0 0.0
    %1668 = vmatmul.mubr.f32.gmra.mxu0 %v1581
    %v1669 = vpop.f32.mrf.mxu0
    %v1670 = vadd.f32 %v1602, %v1669
    %v1671 = vpop.f32.mrf.mxu0
    %1672 = vdwg.mxu0
    %1673 = vst [vmem:[#allocation8] sm:$0xff] %v1670
    // Predicated region
    $region22: #{tpu_custom_call.1} parent=1 // pred_check
      _
    $region23: #{tpu_custom_call.1} parent=1 // pred_check_branch
      %1675 = sbr.rel (0) target = $region25
    $region24: #{tpu_custom_call.1} parent=1 // pred_region
      %s1677 = ssub.s32 128, 128
      %1678 = vsyncadd [#allocation5], %s1677
      %s1680 = sshll.u32 [#allocation8], 4
      %s1681 = int_to_ptr.vmem [resolvable:$true] %s1680
      %1683 = dma.vmem_to_hbm [thread:$0]  %s1681, 128, %s3, [#allocation5]
    $region25: #{tpu_custom_call.1} parent=1 // pred_fallthru
      _
    // Predicated region
    $region26: #{tpu_custom_call.1} parent=1 // pred_check
      _
    $region27: #{tpu_custom_call.1} parent=1 // pred_check_branch
      %1685 = sbr.rel (0) target = $region29
    $region28: #{tpu_custom_call.1} parent=1 // pred_region
      %1686 = dma.done [#allocation5], 128
    $region29: #{tpu_custom_call.1} parent=1 // pred_fallthru
      _
    %1687 = vsyncpa [#allocation4], 1
    %1688 = vsyncpa [#allocation7], 1
    %1689 = vsyncpa [#allocation5], 1

</llo_original>
